<compile_context>
chip_gen: v6e
topology: v6e:2x2x1
jax: 0.10.0
libtpu: 0.0.40
codegen_flags: <defaults>
</compile_context>

<pallas_src>
import jax
import jax.numpy as jnp
from jax.experimental import pallas as pl
from jax.experimental.pallas import tpu as pltpu


def _model_setting_kernel(x_ref, w1_ref, w2_ref, c_ref, o_ref):
    # Backbone stand-in on the MXU: (TB, H)bf16 @ (H, Fp)bf16 -> (TB, Fp) f32.
    feats = jnp.dot(x_ref[...], w1_ref[...], preferred_element_type=jnp.float32)

    # last_layer: NT matmul of the sublane-replicated lane-major weight row
    # against feats -> lane-dense (8, TB) f32 result (row 0 is the answer).
    # Padded feature lanes are zero in w2, so they contribute exactly 0.
    # Folded bias c = b1 @ w2 + b2 comes from SMEM.
    out = jnp.einsum(
        "rf,bf->rb",
        w2_ref[...],
        feats,
        preferred_element_type=jnp.float32,
        precision=jax.lax.Precision.HIGHEST,
    )
    o_ref[...] = (out + c_ref[0, 0]).astype(o_ref.dtype)


def prepare_model_setting_params(w1, b1, w2, b2):
    """One-time parameter packing (hoisted out of the per-call forward path).

    w1: (H, F) backbone stand-in weight (already (in, out)); b1: (1, F);
    w2: (F, 1) last_layer weight; b2: (1, 1) last_layer bias.
    """
    H, F = w1.shape
    Fp = ((F + 127) // 128) * 128  # 1000 -> 1024: exact lane multiple

    # Backbone weight: zero-pad the feature dim, cast to bf16 (MXU operand).
    w1_bf = jnp.pad(w1, ((0, 0), (0, Fp - F))).astype(jnp.bfloat16)

    # last_layer weight kept lane-major (1, Fp) and replicated over 8 sublanes
    # so the in-kernel NT matmul has MXU-native operand shapes and a
    # lane-dense result (no 128x-padded (F, 1) VMEM operand).
    w2_row = jnp.pad(w2.reshape(1, F), ((0, 0), (0, Fp - F))).astype(jnp.float32)
    w2_rep = jnp.tile(w2_row, (8, 1))

    # Fold the backbone bias through the (linear) last layer:
    #   (x @ w1 + b1) @ w2 + b2 = x @ w1 @ w2 + (b1 @ w2 + b2)
    # TODO(synk): only valid while the backbone stand-in is linear.
    c = (jnp.dot(b1, w2, precision=jax.lax.Precision.HIGHEST) + b2).astype(jnp.float32)

    return {"w1_bf": w1_bf, "w2_rep": w2_rep, "c": c}


def model_setting_forward(x, params, *, max_tile_b=256):
    """x: (B, H) f32 -> (B, 1) f32.  `params` from prepare_model_setting_params."""
    w1_bf, w2_rep, c = params["w1_bf"], params["w2_rep"], params["c"]
    B, H = x.shape
    Fp = w1_bf.shape[1]

    # Batch tiling:
    #   * B <= 128: one tile (output lane dim == full array dim, so the store
    #     is still unmasked-legal).
    #   * larger B: >= 2 tiles, each a multiple of 128 lanes (unmasked vst,
    #     megacore-shardable on v7x), capped at 256 so v6e/v7x MXU M stays fed.
    Bp16 = ((B + 15) // 16) * 16
    if Bp16 <= 128:
        tile_b = Bp16
    else:
        tile_b = min(max_tile_b, ((Bp16 + 255) // 256) * 128)
    Bp = pl.cdiv(B, tile_b) * tile_b
    grid = (Bp // tile_b,)

    # Per-call input prep only: bf16 cast (MXU operand) + batch pad.
    x_bf = x.astype(jnp.bfloat16)
    if Bp != B:
        x_bf = jnp.pad(x_bf, ((0, Bp - B), (0, 0)))

    cost = pl.CostEstimate(
        flops=2 * Bp * H * Fp + 2 * 8 * Bp * Fp,
        transcendentals=0,
        bytes_accessed=(x_bf.size * 2 + w1_bf.size * 2
                        + (w2_rep.size + c.size + 8 * Bp) * 4),
    )

    out = pl.pallas_call(
        _model_setting_kernel,
        out_shape=jax.ShapeDtypeStruct((8, Bp), jnp.float32),
        grid_spec=pltpu.PrefetchScalarGridSpec(
            num_scalar_prefetch=0,
            grid=grid,
            in_specs=[
                pl.BlockSpec((tile_b, H), lambda i: (i, 0)),   # x rows (bf16)
                pl.BlockSpec((H, Fp), lambda i: (0, 0)),       # w1 (bf16, grid-invariant)
                pl.BlockSpec((8, Fp), lambda i: (0, 0)),       # w2 row, sublane-replicated
                pl.BlockSpec(memory_space=pltpu.MemorySpace.SMEM),  # folded bias scalar
            ],
            out_specs=pl.BlockSpec((8, tile_b), lambda i: (0, i)),
        ),
        compiler_params=pltpu.CompilerParams(
            dimension_semantics=("parallel",),
        ),
        cost_estimate=cost,
    )(x_bf, w1_bf, w2_rep, c)

    # Row 0 of the sublane-replicated result holds the answer; drop batch pad.
    return out[0, :B].reshape(B, 1)


if __name__ == "__main__":
    B, H, F = 8, 32, 1000  # batch, backbone input width, backbone output dim

    key = jax.random.PRNGKey(0)
    kx, kw1, kb1, kw2, kb2 = jax.random.split(key, 5)

    x = jax.random.normal(kx, (B, H), dtype=jnp.float32)

    # Deterministic synthetic parameters (PyTorch Linear stores (out, in);
    # kept pre-transposed to (in, out) for the kernel).
    w1 = jax.random.normal(kw1, (H, F), dtype=jnp.float32) * (1.0 / jnp.sqrt(H))
    b1 = jax.random.normal(kb1, (1, F), dtype=jnp.float32) * 0.01
    w2 = jax.random.normal(kw2, (F, 1), dtype=jnp.float32) * (1.0 / jnp.sqrt(F))
    b2 = jax.random.normal(kb2, (1, 1), dtype=jnp.float32) * 0.01

    # One-time parameter packing (hoisted out of the per-call path).
    params = jax.tree_util.tree_map(jax.block_until_ready,
                                    prepare_model_setting_params(w1, b1, w2, b2))

    fwd = jax.jit(lambda xx: model_setting_forward(xx, params))
    out = jax.block_until_ready(fwd(x))

    # Pure-JAX reference: apply the same bf16 rounding the kernel applies to
    # the MXU operands of the first layer, then exact f32 matmuls (unfused
    # biases, matching the original module's two-layer form).
    x_r = x.astype(jnp.bfloat16).astype(jnp.float32)
    w1_r = w1.astype(jnp.bfloat16).astype(jnp.float32)
    feats = jnp.dot(x_r, w1_r, precision=jax.lax.Precision.HIGHEST) + b1
    ref = jnp.dot(feats, w2, precision=jax.lax.Precision.HIGHEST) + b2

    assert out.shape == (B, 1)
    assert jnp.allclose(out, ref, atol=1e-2, rtol=1e-2), (
        float(jnp.max(jnp.abs(out - ref))))

    print("KERNEL_OK")
</pallas_src>

<mosaic_0001>
module attributes {stable_mosaic.version = 11 : i64} {
  func.func @_model_setting_kernel(%arg0: i32, %arg1: memref<16x32xbf16, #tpu.memory_space<vmem>>, %arg2: memref<32x1024xbf16, #tpu.memory_space<vmem>>, %arg3: memref<8x1024xf32, #tpu.memory_space<vmem>>, %arg4: memref<1x1xf32, #tpu.memory_space<smem>>, %arg5: memref<8x16xf32, #tpu.memory_space<vmem>>) attributes {dimension_semantics = [#tpu.dimension_semantics<parallel>], iteration_bounds = array<i64: 1>, scalar_prefetch = 0 : i64, scratch_operands = 0 : i64, tpu.core_type = #tpu.core_type<tc>, window_params = [{transform_indices = @transform_0, window_bounds = array<i64: 16, 32>}, {pipeline_mode = #tpu.pipeline_mode<synchronous>, transform_indices = @transform_1, window_bounds = array<i64: 32, 1024>}, {pipeline_mode = #tpu.pipeline_mode<synchronous>, transform_indices = @transform_2, window_bounds = array<i64: 8, 1024>}, {transform_indices = @transform_3, window_bounds = array<i64: 1, 1>}, {transform_indices = @transform_4, window_bounds = array<i64: 8, 16>}]} {
    %c0 = arith.constant 0 : index
    %c0_0 = arith.constant 0 : index
    %0 = vector.load %arg1[%c0, %c0_0] : memref<16x32xbf16, #tpu.memory_space<vmem>>, vector<16x32xbf16>
    %c0_1 = arith.constant 0 : index
    %c0_2 = arith.constant 0 : index
    %1 = vector.load %arg2[%c0_1, %c0_2] : memref<32x1024xbf16, #tpu.memory_space<vmem>>, vector<32x1024xbf16>
    %cst = arith.constant dense<0.000000e+00> : vector<16x1024xf32>
    %2 = tpu.matmul %0, %1, %cst {dimension_numbers = #tpu.dot_dimension_numbers<[1], [0], [0], [1], [0, 0, 1, 1], [], []>} : vector<16x32xbf16>, vector<32x1024xbf16>, vector<16x1024xf32> -> vector<16x1024xf32>
    %c0_3 = arith.constant 0 : index
    %c0_4 = arith.constant 0 : index
    %3 = vector.load %arg3[%c0_3, %c0_4] : memref<8x1024xf32, #tpu.memory_space<vmem>>, vector<8x1024xf32>
    "tpu.trace_start"() <{level = 10 : i32, message = "rf,bf->rb"}> : () -> ()
    %cst_5 = arith.constant dense<0.000000e+00> : vector<8x16xf32>
    %4 = tpu.matmul %3, %2, %cst_5 {dimension_numbers = #tpu.dot_dimension_numbers<[1], [1], [0], [0], [0, 0, 1, 0], [], []>, precision = #tpu.contract_precision<fp32>} : vector<8x1024xf32>, vector<16x1024xf32>, vector<8x16xf32> -> vector<8x16xf32>
    "tpu.trace_stop"() : () -> ()
    %c0_6 = arith.constant 0 : index
    %c0_7 = arith.constant 0 : index
    %5 = memref.load %arg4[%c0_6, %c0_7] : memref<1x1xf32, #tpu.memory_space<smem>>
    %6 = vector.broadcast %5 : f32 to vector<8x16xf32>
    %7 = arith.addf %4, %6 : vector<8x16xf32>
    %c0_8 = arith.constant 0 : index
    %c0_9 = arith.constant 0 : index
    %8 = vector.load %arg5[%c0_8, %c0_9] : memref<8x16xf32, #tpu.memory_space<vmem>>, vector<8x16xf32>
    tpu.vector_store %arg5[%c0_8, %c0_9], %7 {strides = array<i32>} : memref<8x16xf32, #tpu.memory_space<vmem>>, vector<8x16xf32>,
    return
  }
  func.func @transform_0(%arg0: i32) -> (i32, i32) {
    %c0_i32 = arith.constant 0 : i32
    %c0_i32_0 = arith.constant 0 : i32
    return %arg0, %c0_i32 : i32, i32
  }
  func.func @transform_1(%arg0: i32) -> (i32, i32) {
    %c0_i32 = arith.constant 0 : i32
    %c0_i32_0 = arith.constant 0 : i32
    %c0_i32_1 = arith.constant 0 : i32
    return %c0_i32, %c0_i32_0 : i32, i32
  }
  func.func @transform_2(%arg0: i32) -> (i32, i32) {
    %c0_i32 = arith.constant 0 : i32
    %c0_i32_0 = arith.constant 0 : i32
    %c0_i32_1 = arith.constant 0 : i32
    return %c0_i32, %c0_i32_0 : i32, i32
  }
  func.func @transform_3(%arg0: i32) -> (i32, i32) {
    %c0_i32 = arith.constant 0 : i32
    %c0_i32_0 = arith.constant 0 : i32
    %c0_i32_1 = arith.constant 0 : i32
    return %c0_i32, %c0_i32_0 : i32, i32
  }
  func.func @transform_4(%arg0: i32) -> (i32, i32) {
    %c0_i32 = arith.constant 0 : i32
    %c0_i32_0 = arith.constant 0 : i32
    return %c0_i32, %arg0 : i32, i32
  }
}

</mosaic_0001>

<llo_original>
// kernel: _lambda_.1
$region0: #{_lambda_.1}
  #allocation0 [shape = 'u32[]', space=smem, size = 0x4, offset = 0x4, fixed_abs, tag = 'smem constant byte address 0x4 - core index']
  #allocation1 [shape = 'u32[144,128]{1,0:T(1,128)}', space=vmem, size = 0x12000, scoped, tag = 'internal scratch']
  #allocation2 [shape = 'f32[1,1]{1,0:T(1,128)S(6)}', space=smem, size = 0x200, scoped, tag = 'scoped memory for _lambda_.1']
  %s0 = inlined_call_operand.vmem [shape: bf16[16,32], index: 0, kind: input, shape index: {}]
  %s1 = inlined_call_operand.hbm [shape: bf16[32,1024], index: 1, kind: input, shape index: {}]
  %s2 = inlined_call_operand.hbm [shape: f32[8,1024], index: 2, kind: input, shape index: {}]
  %s3 = inlined_call_operand.<no memory space> [shape: f32[1,1], index: 3, kind: input, shape index: {}]
  %s4 = inlined_call_operand.vmem [shape: f32[8,16], index: 4, kind: output, shape index: {}]
  %s5 = sld [smem:[#allocation0]]
  $region34: #{_lambda_.1} parent=0
    _
  %s7 = ssub.s32 1, %s5
  %s8 = scalar_select 0, %s7, %s5
  %9 = sst [smem:[#allocation2]] %s3
  $region1: #{_lambda_.1} parent=0
    #allocation3 [shape = 'u8[65536]{0}', space=vmem, size = 0x10000, scoped, tag = 'input window, operand 1, single buffered']
    #allocation4 [shape = 's32[1]{0}', space=sflag, size = 0x4, scoped, tag = 'scoped memory for _lambda_.1']
    #allocation5 [shape = 'u8[32768]{0}', space=vmem, size = 0x8000, scoped, tag = 'input window, operand 2, single buffered']
    #allocation6 [shape = 's32[1]{0}', space=sflag, size = 0x4, scoped, tag = 'scoped memory for _lambda_.1']
    %10 = vsyncpa [#allocation4], 0
    %11 = vsyncpa [#allocation6], 0
    // Predicated region
    $region2: #{_lambda_.1} parent=1 // pred_check
      _
    $region3: #{_lambda_.1} parent=1 // pred_check_branch
      %13 = sbr.rel (0) target = $region5
    $region4: #{_lambda_.1} parent=1 // pred_region
      _
    $region5: #{_lambda_.1} parent=1 // pred_fallthru
      _
    // Predicated region
    $region6: #{_lambda_.1} parent=1 // pred_check
      _
    $region7: #{_lambda_.1} parent=1 // pred_check_branch
      %15 = sbr.rel (0) target = $region9
    $region8: #{_lambda_.1} parent=1 // pred_region
      %s17 = ssub.s32 2048, 2048
      %18 = vsyncadd [#allocation4], %s17
      %s19 = sshll.u32 [#allocation3], 4
      %s20 = int_to_ptr.vmem [resolvable:$true] %s19
      %25 = dma.hbm_to_vmem [thread:$0]  %s1, 2048, %s20, [#allocation4], 512, 512, 32
    $region9: #{_lambda_.1} parent=1 // pred_fallthru
      _
    // Predicated region
    $region10: #{_lambda_.1} parent=1 // pred_check
      _
    $region11: #{_lambda_.1} parent=1 // pred_check_branch
      %27 = sbr.rel (0) target = $region13
    $region12: #{_lambda_.1} parent=1 // pred_region
      %s29 = ssub.s32 1024, 1024
      %30 = vsyncadd [#allocation6], %s29
      %s32 = sshll.u32 [#allocation5], 4
      %s33 = int_to_ptr.vmem [resolvable:$true] %s32
      %35 = dma.hbm_to_vmem [thread:$0]  %s2, 1024, %s33, [#allocation6]
    $region13: #{_lambda_.1} parent=1 // pred_fallthru
      _
    // Predicated region
    $region14: #{_lambda_.1} parent=1 // pred_check
      _
    $region15: #{_lambda_.1} parent=1 // pred_check_branch
      %37 = sbr.rel (0) target = $region17
    $region16: #{_lambda_.1} parent=1 // pred_region
      _
    $region17: #{_lambda_.1} parent=1 // pred_fallthru
      _
    // Predicated region
    $region18: #{_lambda_.1} parent=1 // pred_check
      _
    $region19: #{_lambda_.1} parent=1 // pred_check_branch
      %39 = sbr.rel (0) target = $region21
    $region20: #{_lambda_.1} parent=1 // pred_region
      %40 = dma.done [#allocation4], 2048
    $region21: #{_lambda_.1} parent=1 // pred_fallthru
      _
    // Predicated region
    $region22: #{_lambda_.1} parent=1 // pred_check
      _
    $region23: #{_lambda_.1} parent=1 // pred_check_branch
      %42 = sbr.rel (0) target = $region25
    $region24: #{_lambda_.1} parent=1 // pred_region
      %43 = dma.done [#allocation6], 1024
    $region25: #{_lambda_.1} parent=1 // pred_fallthru
      _
    %v45 = vld [vmem:[%s0] sm:$0xf]
    %v46 = vld [vmem:[%s0 + $0x4] sm:$0xf]
    %v47 = vld [vmem:[#allocation3] sm:$0xff]
    %v48 = vld [vmem:[#allocation3 + $0x8] sm:$0xff]
    %v49 = vld [vmem:[#allocation3 + $0x10] sm:$0xff]
    %v50 = vld [vmem:[#allocation3 + $0x18] sm:$0xff]
    %v51 = vld [vmem:[#allocation3 + $0x20] sm:$0xff]
    %v52 = vld [vmem:[#allocation3 + $0x28] sm:$0xff]
    %v53 = vld [vmem:[#allocation3 + $0x30] sm:$0xff]
    %v54 = vld [vmem:[#allocation3 + $0x38] sm:$0xff]
    %v55 = vld [vmem:[#allocation3 + $0x40] sm:$0xff]
    %v56 = vld [vmem:[#allocation3 + $0x48] sm:$0xff]
    %v57 = vld [vmem:[#allocation3 + $0x50] sm:$0xff]
    %v58 = vld [vmem:[#allocation3 + $0x58] sm:$0xff]
    %v59 = vld [vmem:[#allocation3 + $0x60] sm:$0xff]
    %v60 = vld [vmem:[#allocation3 + $0x68] sm:$0xff]
    %v61 = vld [vmem:[#allocation3 + $0x70] sm:$0xff]
    %v62 = vld [vmem:[#allocation3 + $0x78] sm:$0xff]
    %v65 = vunpack.c.l.b16 %v45
    %v66 = vunpack.c.l.b16 %v46
    %v67 = vpack.c.b16 %v66, %v65
    %v84 = vunpack.c.l.b16 %v47
    %v85 = vunpack.c.h.b16 %v47
    %v86 = vunpack.c.l.b16 %v48
    %v87 = vunpack.c.h.b16 %v48
    %v88 = vunpack.c.l.b16 %v49
    %v89 = vunpack.c.h.b16 %v49
    %v90 = vunpack.c.l.b16 %v50
    %v91 = vunpack.c.h.b16 %v50
    %v92 = vunpack.c.l.b16 %v51
    %v93 = vunpack.c.h.b16 %v51
    %v94 = vunpack.c.l.b16 %v52
    %v95 = vunpack.c.h.b16 %v52
    %v96 = vunpack.c.l.b16 %v53
    %v97 = vunpack.c.h.b16 %v53
    %v98 = vunpack.c.l.b16 %v54
    %v99 = vunpack.c.h.b16 %v54
    %v100 = vunpack.c.l.b16 %v55
    %v101 = vunpack.c.h.b16 %v55
    %v102 = vunpack.c.l.b16 %v56
    %v103 = vunpack.c.h.b16 %v56
    %v104 = vunpack.c.l.b16 %v57
    %v105 = vunpack.c.h.b16 %v57
    %v106 = vunpack.c.l.b16 %v58
    %v107 = vunpack.c.h.b16 %v58
    %v108 = vunpack.c.l.b16 %v59
    %v109 = vunpack.c.h.b16 %v59
    %v110 = vunpack.c.l.b16 %v60
    %v111 = vunpack.c.h.b16 %v60
    %v112 = vunpack.c.l.b16 %v61
    %v113 = vunpack.c.h.b16 %v61
    %v114 = vunpack.c.l.b16 %v62
    %v115 = vunpack.c.h.b16 %v62
    %v116 = vpack.c.b16 %v92, %v84
    %v117 = vpack.c.b16 %v93, %v85
    %v118 = vpack.c.b16 %v94, %v86
    %v119 = vpack.c.b16 %v95, %v87
    %v120 = vpack.c.b16 %v96, %v88
    %v121 = vpack.c.b16 %v97, %v89
    %v122 = vpack.c.b16 %v98, %v90
    %v123 = vpack.c.b16 %v99, %v91
    %v124 = vpack.c.b16 %v108, %v100
    %v125 = vpack.c.b16 %v109, %v101
    %v126 = vpack.c.b16 %v110, %v102
    %v127 = vpack.c.b16 %v111, %v103
    %v128 = vpack.c.b16 %v112, %v104
    %v129 = vpack.c.b16 %v113, %v105
    %v130 = vpack.c.b16 %v114, %v106
    %v131 = vpack.c.b16 %v115, %v107
    %vm148 = vcmask 261120
    %v150 = vsel %vm148, %v67, 0
    %152 = vmatprep.subr.bf16.mxu0 0
    %153 = vmatpush1.bf16.msra.mxu0 0
    %154 = vmatprep.subr.bf16.mxu0 0
    %155 = vmatpush1.bf16.msra.mxu0 0
    %156 = vmatprep.subr.bf16.mxu0 0
    %157 = vmatpush1.bf16.msra.mxu0 0
    %158 = vmatprep.subr.bf16.mxu0 0
    %159 = vmatpush1.bf16.msra.mxu0 0
    %160 = vmatprep.subr.bf16.mxu0 0
    %161 = vmatpush1.bf16.msra.mxu0 0
    %162 = vmatprep.subr.bf16.mxu0 0
    %163 = vmatpush1.bf16.msra.mxu0 0
    %164 = vmatprep.subr.bf16.mxu0 %v125
    %165 = vmatpush1.bf16.msra.mxu0 %v124
    %166 = vmatprep.subr.bf16.mxu0 %v117
    %167 = vmatpush1.bf16.msra.mxu0 %v116
    %168 = vmatprep.subr.bf16.mxu0 0
    %169 = vmatpush2.bf16.msra.mxu0 0
    %170 = vmatprep.subr.bf16.mxu0 0
    %171 = vmatpush2.bf16.msra.mxu0 0
    %172 = vmatprep.subr.bf16.mxu0 0
    %173 = vmatpush2.bf16.msra.mxu0 0
    %174 = vmatprep.subr.bf16.mxu0 0
    %175 = vmatpush2.bf16.msra.mxu0 0
    %176 = vmatprep.subr.bf16.mxu0 0
    %177 = vmatpush2.bf16.msra.mxu0 0
    %178 = vmatprep.subr.bf16.mxu0 0
    %179 = vmatpush2.bf16.msra.mxu0 0
    %180 = vmatprep.subr.bf16.mxu0 0
    %181 = vmatpush2.bf16.msra.mxu0 0
    %182 = vmatprep.subr.bf16.mxu0 0
    %183 = vmatpush2.bf16.msra.mxu0 0
    %184 = vmatprep.mubr.bf16.mxu0 0
    %185 = vmatmul.mubr.bf16.gmra.mxu0 %v150
    %v186 = vpop.f32.mrf.mxu0
    %v187 = vadd.f32 0.0, %v186
    %v188 = vpop.f32.mrf.mxu0
    %v189 = vadd.f32 0.0, %v188
    %v190 = vpop.f32.mrf.mxu0
    %v191 = vadd.f32 0.0, %v190
    %v192 = vpop.f32.mrf.mxu0
    %v193 = vadd.f32 0.0, %v192
    %194 = vdwg.mxu0
    %195 = vmatprep.subr.bf16.mxu0 0
    %196 = vmatpush1.bf16.msra.mxu0 0
    %197 = vmatprep.subr.bf16.mxu0 0
    %198 = vmatpush1.bf16.msra.mxu0 0
    %199 = vmatprep.subr.bf16.mxu0 0
    %200 = vmatpush1.bf16.msra.mxu0 0
    %201 = vmatprep.subr.bf16.mxu0 0
    %202 = vmatpush1.bf16.msra.mxu0 0
    %203 = vmatprep.subr.bf16.mxu0 0
    %204 = vmatpush1.bf16.msra.mxu0 0
    %205 = vmatprep.subr.bf16.mxu0 0
    %206 = vmatpush1.bf16.msra.mxu0 0
    %207 = vmatprep.subr.bf16.mxu0 %v127
    %208 = vmatpush1.bf16.msra.mxu0 %v126
    %209 = vmatprep.subr.bf16.mxu0 %v119
    %210 = vmatpush1.bf16.msra.mxu0 %v118
    %211 = vmatprep.subr.bf16.mxu0 0
    %212 = vmatpush2.bf16.msra.mxu0 0
    %213 = vmatprep.subr.bf16.mxu0 0
    %214 = vmatpush2.bf16.msra.mxu0 0
    %215 = vmatprep.subr.bf16.mxu0 0
    %216 = vmatpush2.bf16.msra.mxu0 0
    %217 = vmatprep.subr.bf16.mxu0 0
    %218 = vmatpush2.bf16.msra.mxu0 0
    %219 = vmatprep.subr.bf16.mxu0 0
    %220 = vmatpush2.bf16.msra.mxu0 0
    %221 = vmatprep.subr.bf16.mxu0 0
    %222 = vmatpush2.bf16.msra.mxu0 0
    %223 = vmatprep.subr.bf16.mxu0 0
    %224 = vmatpush2.bf16.msra.mxu0 0
    %225 = vmatprep.subr.bf16.mxu0 0
    %226 = vmatpush2.bf16.msra.mxu0 0
    %227 = vmatprep.mubr.bf16.mxu0 0
    %228 = vmatmul.mubr.bf16.gmra.mxu0 %v150
    %v229 = vpop.f32.mrf.mxu0
    %v230 = vadd.f32 0.0, %v229
    %v231 = vpop.f32.mrf.mxu0
    %v232 = vadd.f32 0.0, %v231
    %v233 = vpop.f32.mrf.mxu0
    %v234 = vadd.f32 0.0, %v233
    %v235 = vpop.f32.mrf.mxu0
    %v236 = vadd.f32 0.0, %v235
    %237 = vdwg.mxu0
    %238 = vmatprep.subr.bf16.mxu0 0
    %239 = vmatpush1.bf16.msra.mxu0 0
    %240 = vmatprep.subr.bf16.mxu0 0
    %241 = vmatpush1.bf16.msra.mxu0 0
    %242 = vmatprep.subr.bf16.mxu0 0
    %243 = vmatpush1.bf16.msra.mxu0 0
    %244 = vmatprep.subr.bf16.mxu0 0
    %245 = vmatpush1.bf16.msra.mxu0 0
    %246 = vmatprep.subr.bf16.mxu0 0
    %247 = vmatpush1.bf16.msra.mxu0 0
    %248 = vmatprep.subr.bf16.mxu0 0
    %249 = vmatpush1.bf16.msra.mxu0 0
    %250 = vmatprep.subr.bf16.mxu0 %v129
    %251 = vmatpush1.bf16.msra.mxu0 %v128
    %252 = vmatprep.subr.bf16.mxu0 %v121
    %253 = vmatpush1.bf16.msra.mxu0 %v120
    %254 = vmatprep.subr.bf16.mxu0 0
    %255 = vmatpush2.bf16.msra.mxu0 0
    %256 = vmatprep.subr.bf16.mxu0 0
    %257 = vmatpush2.bf16.msra.mxu0 0
    %258 = vmatprep.subr.bf16.mxu0 0
    %259 = vmatpush2.bf16.msra.mxu0 0
    %260 = vmatprep.subr.bf16.mxu0 0
    %261 = vmatpush2.bf16.msra.mxu0 0
    %262 = vmatprep.subr.bf16.mxu0 0
    %263 = vmatpush2.bf16.msra.mxu0 0
    %264 = vmatprep.subr.bf16.mxu0 0
    %265 = vmatpush2.bf16.msra.mxu0 0
    %266 = vmatprep.subr.bf16.mxu0 0
    %267 = vmatpush2.bf16.msra.mxu0 0
    %268 = vmatprep.subr.bf16.mxu0 0
    %269 = vmatpush2.bf16.msra.mxu0 0
    %270 = vmatprep.mubr.bf16.mxu0 0
    %271 = vmatmul.mubr.bf16.gmra.mxu0 %v150
    %v272 = vpop.f32.mrf.mxu0
    %v273 = vadd.f32 0.0, %v272
    %v274 = vpop.f32.mrf.mxu0
    %v275 = vadd.f32 0.0, %v274
    %v276 = vpop.f32.mrf.mxu0
    %v277 = vadd.f32 0.0, %v276
    %v278 = vpop.f32.mrf.mxu0
    %v279 = vadd.f32 0.0, %v278
    %280 = vdwg.mxu0
    %281 = vmatprep.subr.bf16.mxu0 0
    %282 = vmatpush1.bf16.msra.mxu0 0
    %283 = vmatprep.subr.bf16.mxu0 0
    %284 = vmatpush1.bf16.msra.mxu0 0
    %285 = vmatprep.subr.bf16.mxu0 0
    %286 = vmatpush1.bf16.msra.mxu0 0
    %287 = vmatprep.subr.bf16.mxu0 0
    %288 = vmatpush1.bf16.msra.mxu0 0
    %289 = vmatprep.subr.bf16.mxu0 0
    %290 = vmatpush1.bf16.msra.mxu0 0
    %291 = vmatprep.subr.bf16.mxu0 0
    %292 = vmatpush1.bf16.msra.mxu0 0
    %293 = vmatprep.subr.bf16.mxu0 %v131
    %294 = vmatpush1.bf16.msra.mxu0 %v130
    %295 = vmatprep.subr.bf16.mxu0 %v123
    %296 = vmatpush1.bf16.msra.mxu0 %v122
    %297 = vmatprep.subr.bf16.mxu0 0
    %298 = vmatpush2.bf16.msra.mxu0 0
    %299 = vmatprep.subr.bf16.mxu0 0
    %300 = vmatpush2.bf16.msra.mxu0 0
    %301 = vmatprep.subr.bf16.mxu0 0
    %302 = vmatpush2.bf16.msra.mxu0 0
    %303 = vmatprep.subr.bf16.mxu0 0
    %304 = vmatpush2.bf16.msra.mxu0 0
    %305 = vmatprep.subr.bf16.mxu0 0
    %306 = vmatpush2.bf16.msra.mxu0 0
    %307 = vmatprep.subr.bf16.mxu0 0
    %308 = vmatpush2.bf16.msra.mxu0 0
    %309 = vmatprep.subr.bf16.mxu0 0
    %310 = vmatpush2.bf16.msra.mxu0 0
    %311 = vmatprep.subr.bf16.mxu0 0
    %312 = vmatpush2.bf16.msra.mxu0 0
    %313 = vmatprep.mubr.bf16.mxu0 0
    %314 = vmatmul.mubr.bf16.gmra.mxu0 %v150
    %v315 = vpop.f32.mrf.mxu0
    %v316 = vadd.f32 0.0, %v315
    %v317 = vpop.f32.mrf.mxu0
    %v318 = vadd.f32 0.0, %v317
    %v319 = vpop.f32.mrf.mxu0
    %v320 = vadd.f32 0.0, %v319
    %v321 = vpop.f32.mrf.mxu0
    %v322 = vadd.f32 0.0, %v321
    %323 = vdwg.mxu0
    %v324 = vld [vmem:[#allocation5] sm:$0xff]
    %v325 = vld [vmem:[#allocation5 + $0x8] sm:$0xff]
    %v326 = vld [vmem:[#allocation5 + $0x10] sm:$0xff]
    %v327 = vld [vmem:[#allocation5 + $0x18] sm:$0xff]
    %v328 = vld [vmem:[#allocation5 + $0x20] sm:$0xff]
    %v329 = vld [vmem:[#allocation5 + $0x28] sm:$0xff]
    %v330 = vld [vmem:[#allocation5 + $0x30] sm:$0xff]
    %v331 = vld [vmem:[#allocation5 + $0x38] sm:$0xff]
    %s332 = sld [smem:[#allocation2]]
    %v333 = vstv %s332
    %334 = vmatprep.subr.mxu0 0.0
    %335 = vmatpush1.xpose.msra.mxu0 0.0
    %336 = vmatprep.subr.mxu0 0.0
    %337 = vmatpush1.xpose.msra.mxu0 0.0
    %338 = vmatprep.subr.mxu0 0.0
    %339 = vmatpush1.xpose.msra.mxu0 0.0
    %340 = vmatprep.subr.mxu0 0.0
    %341 = vmatpush1.xpose.msra.mxu0 0.0
    %342 = vmatprep.subr.mxu0 0.0
    %343 = vmatpush1.xpose.msra.mxu0 0.0
    %344 = vmatprep.subr.mxu0 0.0
    %345 = vmatpush1.xpose.msra.mxu0 0.0
    %346 = vmatprep.subr.mxu0 0.0
    %347 = vmatpush1.xpose.msra.mxu0 0.0
    %348 = vmatprep.subr.mxu0 0.0
    %349 = vmatpush1.xpose.msra.mxu0 0.0
    %350 = vmatprep.subr.mxu0 0.0
    %351 = vmatpush1.xpose.msra.mxu0 0.0
    %352 = vmatprep.subr.mxu0 0.0
    %353 = vmatpush1.xpose.msra.mxu0 0.0
    %354 = vmatprep.subr.mxu0 0.0
    %355 = vmatpush1.xpose.msra.mxu0 0.0
    %356 = vmatprep.subr.mxu0 0.0
    %357 = vmatpush1.xpose.msra.mxu0 0.0
    %358 = vmatprep.subr.mxu0 0.0
    %359 = vmatpush1.xpose.msra.mxu0 0.0
    %360 = vmatprep.subr.mxu0 0.0
    %361 = vmatpush1.xpose.msra.mxu0 0.0
    %v362 = vand.u32 %v193, 4294901760
    %363 = vmatprep.subr.mxu0 %v362
    %v364 = vand.u32 %v191, 4294901760
    %365 = vmatpush1.xpose.msra.mxu0 %v364
    %v366 = vand.u32 %v189, 4294901760
    %367 = vmatprep.subr.mxu0 %v366
    %v368 = vand.u32 %v187, 4294901760
    %369 = vmatpush1.xpose.msra.mxu0 %v368
    %370 = vmatprep.subr.mxu0 0.0
    %371 = vmatpush2.xpose.msra.mxu0 0.0
    %372 = vmatprep.subr.mxu0 0.0
    %373 = vmatpush2.xpose.msra.mxu0 0.0
    %374 = vmatprep.subr.mxu0 0.0
    %375 = vmatpush2.xpose.msra.mxu0 0.0
    %376 = vmatprep.subr.mxu0 0.0
    %377 = vmatpush2.xpose.msra.mxu0 0.0
    %378 = vmatprep.subr.mxu0 0.0
    %379 = vmatpush2.xpose.msra.mxu0 0.0
    %380 = vmatprep.subr.mxu0 0.0
    %381 = vmatpush2.xpose.msra.mxu0 0.0
    %382 = vmatprep.subr.mxu0 0.0
    %383 = vmatpush2.xpose.msra.mxu0 0.0
    %384 = vmatprep.subr.mxu0 0.0
    %385 = vmatpush2.xpose.msra.mxu0 0.0
    %386 = vmatprep.subr.mxu0 0.0
    %387 = vmatpush2.xpose.msra.mxu0 0.0
    %388 = vmatprep.subr.mxu0 0.0
    %389 = vmatpush2.xpose.msra.mxu0 0.0
    %390 = vmatprep.subr.mxu0 0.0
    %391 = vmatpush2.xpose.msra.mxu0 0.0
    %392 = vmatprep.subr.mxu0 0.0
    %393 = vmatpush2.xpose.msra.mxu0 0.0
    %394 = vmatprep.subr.mxu0 0.0
    %395 = vmatpush2.xpose.msra.mxu0 0.0
    %396 = vmatprep.subr.mxu0 0.0
    %397 = vmatpush2.xpose.msra.mxu0 0.0
    %398 = vmatprep.subr.mxu0 0.0
    %399 = vmatpush2.xpose.msra.mxu0 0.0
    %400 = vmatprep.subr.mxu0 0.0
    %401 = vmatpush2.xpose.msra.mxu0 0.0
    %v402 = vand.u32 %v325, 4294901760
    %v403 = vsub.f32 %v325, %v402
    %v404 = vand.u32 %v403, 4294901760
    %v405 = vsub.f32 %v403, %v404
    %v406 = vand.u32 %v405, 4294901760
    %407 = vmatprep.mubr.f32.mxu0 %v406
    %v408 = vand.u32 %v324, 4294901760
    %v409 = vsub.f32 %v324, %v408
    %v410 = vand.u32 %v409, 4294901760
    %v411 = vsub.f32 %v409, %v410
    %v412 = vand.u32 %v411, 4294901760
    %413 = vmatmul.mubr.f32.gmra.mxu0 %v412
    %v414 = vpop.f32.mrf.mxu0
    %v415 = vadd.f32 %v333, %v414
    %v416 = vpop.f32.mrf.mxu0
    %417 = vdwg.mxu0
    %418 = vmatprep.subr.mxu0 0.0
    %419 = vmatpush1.xpose.msra.mxu0 0.0
    %420 = vmatprep.subr.mxu0 0.0
    %421 = vmatpush1.xpose.msra.mxu0 0.0
    %422 = vmatprep.subr.mxu0 0.0
    %423 = vmatpush1.xpose.msra.mxu0 0.0
    %424 = vmatprep.subr.mxu0 0.0
    %425 = vmatpush1.xpose.msra.mxu0 0.0
    %426 = vmatprep.subr.mxu0 0.0
    %427 = vmatpush1.xpose.msra.mxu0 0.0
    %428 = vmatprep.subr.mxu0 0.0
    %429 = vmatpush1.xpose.msra.mxu0 0.0
    %430 = vmatprep.subr.mxu0 0.0
    %431 = vmatpush1.xpose.msra.mxu0 0.0
    %432 = vmatprep.subr.mxu0 0.0
    %433 = vmatpush1.xpose.msra.mxu0 0.0
    %434 = vmatprep.subr.mxu0 0.0
    %435 = vmatpush1.xpose.msra.mxu0 0.0
    %436 = vmatprep.subr.mxu0 0.0
    %437 = vmatpush1.xpose.msra.mxu0 0.0
    %438 = vmatprep.subr.mxu0 0.0
    %439 = vmatpush1.xpose.msra.mxu0 0.0
    %440 = vmatprep.subr.mxu0 0.0
    %441 = vmatpush1.xpose.msra.mxu0 0.0
    %442 = vmatprep.subr.mxu0 0.0
    %443 = vmatpush1.xpose.msra.mxu0 0.0
    %444 = vmatprep.subr.mxu0 0.0
    %445 = vmatpush1.xpose.msra.mxu0 0.0
    %v446 = vand.u32 %v193, 4294901760
    %v447 = vsub.f32 %v193, %v446
    %v448 = vand.u32 %v447, 4294901760
    %v449 = vsub.f32 %v447, %v448
    %v450 = vand.u32 %v449, 4294901760
    %451 = vmatprep.subr.mxu0 %v450
    %v452 = vand.u32 %v191, 4294901760
    %v453 = vsub.f32 %v191, %v452
    %v454 = vand.u32 %v453, 4294901760
    %v455 = vsub.f32 %v453, %v454
    %v456 = vand.u32 %v455, 4294901760
    %457 = vmatpush1.xpose.msra.mxu0 %v456
    %v458 = vand.u32 %v189, 4294901760
    %v459 = vsub.f32 %v189, %v458
    %v460 = vand.u32 %v459, 4294901760
    %v461 = vsub.f32 %v459, %v460
    %v462 = vand.u32 %v461, 4294901760
    %463 = vmatprep.subr.mxu0 %v462
    %v464 = vand.u32 %v187, 4294901760
    %v465 = vsub.f32 %v187, %v464
    %v466 = vand.u32 %v465, 4294901760
    %v467 = vsub.f32 %v465, %v466
    %v468 = vand.u32 %v467, 4294901760
    %469 = vmatpush1.xpose.msra.mxu0 %v468
    %470 = vmatprep.subr.mxu0 0.0
    %471 = vmatpush2.xpose.msra.mxu0 0.0
    %472 = vmatprep.subr.mxu0 0.0
    %473 = vmatpush2.xpose.msra.mxu0 0.0
    %474 = vmatprep.subr.mxu0 0.0
    %475 = vmatpush2.xpose.msra.mxu0 0.0
    %476 = vmatprep.subr.mxu0 0.0
    %477 = vmatpush2.xpose.msra.mxu0 0.0
    %478 = vmatprep.subr.mxu0 0.0
    %479 = vmatpush2.xpose.msra.mxu0 0.0
    %480 = vmatprep.subr.mxu0 0.0
    %481 = vmatpush2.xpose.msra.mxu0 0.0
    %482 = vmatprep.subr.mxu0 0.0
    %483 = vmatpush2.xpose.msra.mxu0 0.0
    %484 = vmatprep.subr.mxu0 0.0
    %485 = vmatpush2.xpose.msra.mxu0 0.0
    %486 = vmatprep.subr.mxu0 0.0
    %487 = vmatpush2.xpose.msra.mxu0 0.0
    %488 = vmatprep.subr.mxu0 0.0
    %489 = vmatpush2.xpose.msra.mxu0 0.0
    %490 = vmatprep.subr.mxu0 0.0
    %491 = vmatpush2.xpose.msra.mxu0 0.0
    %492 = vmatprep.subr.mxu0 0.0
    %493 = vmatpush2.xpose.msra.mxu0 0.0
    %494 = vmatprep.subr.mxu0 0.0
    %495 = vmatpush2.xpose.msra.mxu0 0.0
    %496 = vmatprep.subr.mxu0 0.0
    %497 = vmatpush2.xpose.msra.mxu0 0.0
    %498 = vmatprep.subr.mxu0 0.0
    %499 = vmatpush2.xpose.msra.mxu0 0.0
    %500 = vmatprep.subr.mxu0 0.0
    %501 = vmatpush2.xpose.msra.mxu0 0.0
    %v502 = vand.u32 %v325, 4294901760
    %503 = vmatprep.mubr.f32.mxu0 %v502
    %v504 = vand.u32 %v324, 4294901760
    %505 = vmatmul.mubr.f32.gmra.mxu0 %v504
    %v506 = vpop.f32.mrf.mxu0
    %v507 = vadd.f32 %v415, %v506
    %v508 = vpop.f32.mrf.mxu0
    %509 = vdwg.mxu0
    %510 = vmatprep.subr.mxu0 0.0
    %511 = vmatpush1.xpose.msra.mxu0 0.0
    %512 = vmatprep.subr.mxu0 0.0
    %513 = vmatpush1.xpose.msra.mxu0 0.0
    %514 = vmatprep.subr.mxu0 0.0
    %515 = vmatpush1.xpose.msra.mxu0 0.0
    %516 = vmatprep.subr.mxu0 0.0
    %517 = vmatpush1.xpose.msra.mxu0 0.0
    %518 = vmatprep.subr.mxu0 0.0
    %519 = vmatpush1.xpose.msra.mxu0 0.0
    %520 = vmatprep.subr.mxu0 0.0
    %521 = vmatpush1.xpose.msra.mxu0 0.0
    %522 = vmatprep.subr.mxu0 0.0
    %523 = vmatpush1.xpose.msra.mxu0 0.0
    %524 = vmatprep.subr.mxu0 0.0
    %525 = vmatpush1.xpose.msra.mxu0 0.0
    %526 = vmatprep.subr.mxu0 0.0
    %527 = vmatpush1.xpose.msra.mxu0 0.0
    %528 = vmatprep.subr.mxu0 0.0
    %529 = vmatpush1.xpose.msra.mxu0 0.0
    %530 = vmatprep.subr.mxu0 0.0
    %531 = vmatpush1.xpose.msra.mxu0 0.0
    %532 = vmatprep.subr.mxu0 0.0
    %533 = vmatpush1.xpose.msra.mxu0 0.0
    %534 = vmatprep.subr.mxu0 0.0
    %535 = vmatpush1.xpose.msra.mxu0 0.0
    %536 = vmatprep.subr.mxu0 0.0
    %537 = vmatpush1.xpose.msra.mxu0 0.0
    %v538 = vand.u32 %v193, 4294901760
    %v539 = vsub.f32 %v193, %v538
    %540 = vmatprep.subr.mxu0 %v539
    %v541 = vand.u32 %v191, 4294901760
    %v542 = vsub.f32 %v191, %v541
    %543 = vmatpush1.xpose.msra.mxu0 %v542
    %v544 = vand.u32 %v189, 4294901760
    %v545 = vsub.f32 %v189, %v544
    %546 = vmatprep.subr.mxu0 %v545
    %v547 = vand.u32 %v187, 4294901760
    %v548 = vsub.f32 %v187, %v547
    %549 = vmatpush1.xpose.msra.mxu0 %v548
    %550 = vmatprep.subr.mxu0 0.0
    %551 = vmatpush2.xpose.msra.mxu0 0.0
    %552 = vmatprep.subr.mxu0 0.0
    %553 = vmatpush2.xpose.msra.mxu0 0.0
    %554 = vmatprep.subr.mxu0 0.0
    %555 = vmatpush2.xpose.msra.mxu0 0.0
    %556 = vmatprep.subr.mxu0 0.0
    %557 = vmatpush2.xpose.msra.mxu0 0.0
    %558 = vmatprep.subr.mxu0 0.0
    %559 = vmatpush2.xpose.msra.mxu0 0.0
    %560 = vmatprep.subr.mxu0 0.0
    %561 = vmatpush2.xpose.msra.mxu0 0.0
    %562 = vmatprep.subr.mxu0 0.0
    %563 = vmatpush2.xpose.msra.mxu0 0.0
    %564 = vmatprep.subr.mxu0 0.0
    %565 = vmatpush2.xpose.msra.mxu0 0.0
    %566 = vmatprep.subr.mxu0 0.0
    %567 = vmatpush2.xpose.msra.mxu0 0.0
    %568 = vmatprep.subr.mxu0 0.0
    %569 = vmatpush2.xpose.msra.mxu0 0.0
    %570 = vmatprep.subr.mxu0 0.0
    %571 = vmatpush2.xpose.msra.mxu0 0.0
    %572 = vmatprep.subr.mxu0 0.0
    %573 = vmatpush2.xpose.msra.mxu0 0.0
    %574 = vmatprep.subr.mxu0 0.0
    %575 = vmatpush2.xpose.msra.mxu0 0.0
    %576 = vmatprep.subr.mxu0 0.0
    %577 = vmatpush2.xpose.msra.mxu0 0.0
    %578 = vmatprep.subr.mxu0 0.0
    %579 = vmatpush2.xpose.msra.mxu0 0.0
    %580 = vmatprep.subr.mxu0 0.0
    %581 = vmatpush2.xpose.msra.mxu0 0.0
    %v582 = vand.u32 %v325, 4294901760
    %v583 = vsub.f32 %v325, %v582
    %584 = vmatprep.mubr.f32.mxu0 %v583
    %v585 = vand.u32 %v324, 4294901760
    %v586 = vsub.f32 %v324, %v585
    %587 = vmatmul.mubr.f32.gmra.mxu0 %v586
    %v588 = vpop.f32.mrf.mxu0
    %v589 = vadd.f32 %v507, %v588
    %v590 = vpop.f32.mrf.mxu0
    %591 = vdwg.mxu0
    %592 = vmatprep.subr.mxu0 0.0
    %593 = vmatpush1.xpose.msra.mxu0 0.0
    %594 = vmatprep.subr.mxu0 0.0
    %595 = vmatpush1.xpose.msra.mxu0 0.0
    %596 = vmatprep.subr.mxu0 0.0
    %597 = vmatpush1.xpose.msra.mxu0 0.0
    %598 = vmatprep.subr.mxu0 0.0
    %599 = vmatpush1.xpose.msra.mxu0 0.0
    %600 = vmatprep.subr.mxu0 0.0
    %601 = vmatpush1.xpose.msra.mxu0 0.0
    %602 = vmatprep.subr.mxu0 0.0
    %603 = vmatpush1.xpose.msra.mxu0 0.0
    %604 = vmatprep.subr.mxu0 0.0
    %605 = vmatpush1.xpose.msra.mxu0 0.0
    %606 = vmatprep.subr.mxu0 0.0
    %607 = vmatpush1.xpose.msra.mxu0 0.0
    %608 = vmatprep.subr.mxu0 0.0
    %609 = vmatpush1.xpose.msra.mxu0 0.0
    %610 = vmatprep.subr.mxu0 0.0
    %611 = vmatpush1.xpose.msra.mxu0 0.0
    %612 = vmatprep.subr.mxu0 0.0
    %613 = vmatpush1.xpose.msra.mxu0 0.0
    %614 = vmatprep.subr.mxu0 0.0
    %615 = vmatpush1.xpose.msra.mxu0 0.0
    %616 = vmatprep.subr.mxu0 0.0
    %617 = vmatpush1.xpose.msra.mxu0 0.0
    %618 = vmatprep.subr.mxu0 0.0
    %619 = vmatpush1.xpose.msra.mxu0 0.0
    %v620 = vand.u32 %v193, 4294901760
    %621 = vmatprep.subr.mxu0 %v620
    %v622 = vand.u32 %v191, 4294901760
    %623 = vmatpush1.xpose.msra.mxu0 %v622
    %v624 = vand.u32 %v189, 4294901760
    %625 = vmatprep.subr.mxu0 %v624
    %v626 = vand.u32 %v187, 4294901760
    %627 = vmatpush1.xpose.msra.mxu0 %v626
    %628 = vmatprep.subr.mxu0 0.0
    %629 = vmatpush2.xpose.msra.mxu0 0.0
    %630 = vmatprep.subr.mxu0 0.0
    %631 = vmatpush2.xpose.msra.mxu0 0.0
    %632 = vmatprep.subr.mxu0 0.0
    %633 = vmatpush2.xpose.msra.mxu0 0.0
    %634 = vmatprep.subr.mxu0 0.0
    %635 = vmatpush2.xpose.msra.mxu0 0.0
    %636 = vmatprep.subr.mxu0 0.0
    %637 = vmatpush2.xpose.msra.mxu0 0.0
    %638 = vmatprep.subr.mxu0 0.0
    %639 = vmatpush2.xpose.msra.mxu0 0.0
    %640 = vmatprep.subr.mxu0 0.0
    %641 = vmatpush2.xpose.msra.mxu0 0.0
    %642 = vmatprep.subr.mxu0 0.0
    %643 = vmatpush2.xpose.msra.mxu0 0.0
    %644 = vmatprep.subr.mxu0 0.0
    %645 = vmatpush2.xpose.msra.mxu0 0.0
    %646 = vmatprep.subr.mxu0 0.0
    %647 = vmatpush2.xpose.msra.mxu0 0.0
    %648 = vmatprep.subr.mxu0 0.0
    %649 = vmatpush2.xpose.msra.mxu0 0.0
    %650 = vmatprep.subr.mxu0 0.0
    %651 = vmatpush2.xpose.msra.mxu0 0.0
    %652 = vmatprep.subr.mxu0 0.0
    %653 = vmatpush2.xpose.msra.mxu0 0.0
    %654 = vmatprep.subr.mxu0 0.0
    %655 = vmatpush2.xpose.msra.mxu0 0.0
    %656 = vmatprep.subr.mxu0 0.0
    %657 = vmatpush2.xpose.msra.mxu0 0.0
    %658 = vmatprep.subr.mxu0 0.0
    %659 = vmatpush2.xpose.msra.mxu0 0.0
    %v660 = vand.u32 %v325, 4294901760
    %v661 = vsub.f32 %v325, %v660
    %v662 = vand.u32 %v661, 4294901760
    %663 = vmatprep.mubr.f32.mxu0 %v662
    %v664 = vand.u32 %v324, 4294901760
    %v665 = vsub.f32 %v324, %v664
    %v666 = vand.u32 %v665, 4294901760
    %667 = vmatmul.mubr.f32.gmra.mxu0 %v666
    %v668 = vpop.f32.mrf.mxu0
    %v669 = vadd.f32 %v589, %v668
    %v670 = vpop.f32.mrf.mxu0
    %671 = vdwg.mxu0
    %672 = vmatprep.subr.mxu0 0.0
    %673 = vmatpush1.xpose.msra.mxu0 0.0
    %674 = vmatprep.subr.mxu0 0.0
    %675 = vmatpush1.xpose.msra.mxu0 0.0
    %676 = vmatprep.subr.mxu0 0.0
    %677 = vmatpush1.xpose.msra.mxu0 0.0
    %678 = vmatprep.subr.mxu0 0.0
    %679 = vmatpush1.xpose.msra.mxu0 0.0
    %680 = vmatprep.subr.mxu0 0.0
    %681 = vmatpush1.xpose.msra.mxu0 0.0
    %682 = vmatprep.subr.mxu0 0.0
    %683 = vmatpush1.xpose.msra.mxu0 0.0
    %684 = vmatprep.subr.mxu0 0.0
    %685 = vmatpush1.xpose.msra.mxu0 0.0
    %686 = vmatprep.subr.mxu0 0.0
    %687 = vmatpush1.xpose.msra.mxu0 0.0
    %688 = vmatprep.subr.mxu0 0.0
    %689 = vmatpush1.xpose.msra.mxu0 0.0
    %690 = vmatprep.subr.mxu0 0.0
    %691 = vmatpush1.xpose.msra.mxu0 0.0
    %692 = vmatprep.subr.mxu0 0.0
    %693 = vmatpush1.xpose.msra.mxu0 0.0
    %694 = vmatprep.subr.mxu0 0.0
    %695 = vmatpush1.xpose.msra.mxu0 0.0
    %696 = vmatprep.subr.mxu0 0.0
    %697 = vmatpush1.xpose.msra.mxu0 0.0
    %698 = vmatprep.subr.mxu0 0.0
    %699 = vmatpush1.xpose.msra.mxu0 0.0
    %v700 = vand.u32 %v193, 4294901760
    %v701 = vsub.f32 %v193, %v700
    %v702 = vand.u32 %v701, 4294901760
    %703 = vmatprep.subr.mxu0 %v702
    %v704 = vand.u32 %v191, 4294901760
    %v705 = vsub.f32 %v191, %v704
    %v706 = vand.u32 %v705, 4294901760
    %707 = vmatpush1.xpose.msra.mxu0 %v706
    %v708 = vand.u32 %v189, 4294901760
    %v709 = vsub.f32 %v189, %v708
    %v710 = vand.u32 %v709, 4294901760
    %711 = vmatprep.subr.mxu0 %v710
    %v712 = vand.u32 %v187, 4294901760
    %v713 = vsub.f32 %v187, %v712
    %v714 = vand.u32 %v713, 4294901760
    %715 = vmatpush1.xpose.msra.mxu0 %v714
    %716 = vmatprep.subr.mxu0 0.0
    %717 = vmatpush2.xpose.msra.mxu0 0.0
    %718 = vmatprep.subr.mxu0 0.0
    %719 = vmatpush2.xpose.msra.mxu0 0.0
    %720 = vmatprep.subr.mxu0 0.0
    %721 = vmatpush2.xpose.msra.mxu0 0.0
    %722 = vmatprep.subr.mxu0 0.0
    %723 = vmatpush2.xpose.msra.mxu0 0.0
    %724 = vmatprep.subr.mxu0 0.0
    %725 = vmatpush2.xpose.msra.mxu0 0.0
    %726 = vmatprep.subr.mxu0 0.0
    %727 = vmatpush2.xpose.msra.mxu0 0.0
    %728 = vmatprep.subr.mxu0 0.0
    %729 = vmatpush2.xpose.msra.mxu0 0.0
    %730 = vmatprep.subr.mxu0 0.0
    %731 = vmatpush2.xpose.msra.mxu0 0.0
    %732 = vmatprep.subr.mxu0 0.0
    %733 = vmatpush2.xpose.msra.mxu0 0.0
    %734 = vmatprep.subr.mxu0 0.0
    %735 = vmatpush2.xpose.msra.mxu0 0.0
    %736 = vmatprep.subr.mxu0 0.0
    %737 = vmatpush2.xpose.msra.mxu0 0.0
    %738 = vmatprep.subr.mxu0 0.0
    %739 = vmatpush2.xpose.msra.mxu0 0.0
    %740 = vmatprep.subr.mxu0 0.0
    %741 = vmatpush2.xpose.msra.mxu0 0.0
    %742 = vmatprep.subr.mxu0 0.0
    %743 = vmatpush2.xpose.msra.mxu0 0.0
    %744 = vmatprep.subr.mxu0 0.0
    %745 = vmatpush2.xpose.msra.mxu0 0.0
    %746 = vmatprep.subr.mxu0 0.0
    %747 = vmatpush2.xpose.msra.mxu0 0.0
    %v748 = vand.u32 %v325, 4294901760
    %749 = vmatprep.mubr.f32.mxu0 %v748
    %v750 = vand.u32 %v324, 4294901760
    %751 = vmatmul.mubr.f32.gmra.mxu0 %v750
    %v752 = vpop.f32.mrf.mxu0
    %v753 = vadd.f32 %v669, %v752
    %v754 = vpop.f32.mrf.mxu0
    %755 = vdwg.mxu0
    %756 = vmatprep.subr.mxu0 0.0
    %757 = vmatpush1.xpose.msra.mxu0 0.0
    %758 = vmatprep.subr.mxu0 0.0
    %759 = vmatpush1.xpose.msra.mxu0 0.0
    %760 = vmatprep.subr.mxu0 0.0
    %761 = vmatpush1.xpose.msra.mxu0 0.0
    %762 = vmatprep.subr.mxu0 0.0
    %763 = vmatpush1.xpose.msra.mxu0 0.0
    %764 = vmatprep.subr.mxu0 0.0
    %765 = vmatpush1.xpose.msra.mxu0 0.0
    %766 = vmatprep.subr.mxu0 0.0
    %767 = vmatpush1.xpose.msra.mxu0 0.0
    %768 = vmatprep.subr.mxu0 0.0
    %769 = vmatpush1.xpose.msra.mxu0 0.0
    %770 = vmatprep.subr.mxu0 0.0
    %771 = vmatpush1.xpose.msra.mxu0 0.0
    %772 = vmatprep.subr.mxu0 0.0
    %773 = vmatpush1.xpose.msra.mxu0 0.0
    %774 = vmatprep.subr.mxu0 0.0
    %775 = vmatpush1.xpose.msra.mxu0 0.0
    %776 = vmatprep.subr.mxu0 0.0
    %777 = vmatpush1.xpose.msra.mxu0 0.0
    %778 = vmatprep.subr.mxu0 0.0
    %779 = vmatpush1.xpose.msra.mxu0 0.0
    %780 = vmatprep.subr.mxu0 0.0
    %781 = vmatpush1.xpose.msra.mxu0 0.0
    %782 = vmatprep.subr.mxu0 0.0
    %783 = vmatpush1.xpose.msra.mxu0 0.0
    %v784 = vand.u32 %v193, 4294901760
    %785 = vmatprep.subr.mxu0 %v784
    %v786 = vand.u32 %v191, 4294901760
    %787 = vmatpush1.xpose.msra.mxu0 %v786
    %v788 = vand.u32 %v189, 4294901760
    %789 = vmatprep.subr.mxu0 %v788
    %v790 = vand.u32 %v187, 4294901760
    %791 = vmatpush1.xpose.msra.mxu0 %v790
    %792 = vmatprep.subr.mxu0 0.0
    %793 = vmatpush2.xpose.msra.mxu0 0.0
    %794 = vmatprep.subr.mxu0 0.0
    %795 = vmatpush2.xpose.msra.mxu0 0.0
    %796 = vmatprep.subr.mxu0 0.0
    %797 = vmatpush2.xpose.msra.mxu0 0.0
    %798 = vmatprep.subr.mxu0 0.0
    %799 = vmatpush2.xpose.msra.mxu0 0.0
    %800 = vmatprep.subr.mxu0 0.0
    %801 = vmatpush2.xpose.msra.mxu0 0.0
    %802 = vmatprep.subr.mxu0 0.0
    %803 = vmatpush2.xpose.msra.mxu0 0.0
    %804 = vmatprep.subr.mxu0 0.0
    %805 = vmatpush2.xpose.msra.mxu0 0.0
    %806 = vmatprep.subr.mxu0 0.0
    %807 = vmatpush2.xpose.msra.mxu0 0.0
    %808 = vmatprep.subr.mxu0 0.0
    %809 = vmatpush2.xpose.msra.mxu0 0.0
    %810 = vmatprep.subr.mxu0 0.0
    %811 = vmatpush2.xpose.msra.mxu0 0.0
    %812 = vmatprep.subr.mxu0 0.0
    %813 = vmatpush2.xpose.msra.mxu0 0.0
    %814 = vmatprep.subr.mxu0 0.0
    %815 = vmatpush2.xpose.msra.mxu0 0.0
    %816 = vmatprep.subr.mxu0 0.0
    %817 = vmatpush2.xpose.msra.mxu0 0.0
    %818 = vmatprep.subr.mxu0 0.0
    %819 = vmatpush2.xpose.msra.mxu0 0.0
    %820 = vmatprep.subr.mxu0 0.0
    %821 = vmatpush2.xpose.msra.mxu0 0.0
    %822 = vmatprep.subr.mxu0 0.0
    %823 = vmatpush2.xpose.msra.mxu0 0.0
    %v824 = vand.u32 %v325, 4294901760
    %825 = vmatprep.mubr.f32.mxu0 %v824
    %v826 = vand.u32 %v324, 4294901760
    %827 = vmatmul.mubr.f32.gmra.mxu0 %v826
    %v828 = vpop.f32.mrf.mxu0
    %v829 = vadd.f32 %v753, %v828
    %v830 = vpop.f32.mrf.mxu0
    %831 = vdwg.mxu0
    %832 = vmatprep.subr.mxu0 0.0
    %833 = vmatpush1.xpose.msra.mxu0 0.0
    %834 = vmatprep.subr.mxu0 0.0
    %835 = vmatpush1.xpose.msra.mxu0 0.0
    %836 = vmatprep.subr.mxu0 0.0
    %837 = vmatpush1.xpose.msra.mxu0 0.0
    %838 = vmatprep.subr.mxu0 0.0
    %839 = vmatpush1.xpose.msra.mxu0 0.0
    %840 = vmatprep.subr.mxu0 0.0
    %841 = vmatpush1.xpose.msra.mxu0 0.0
    %842 = vmatprep.subr.mxu0 0.0
    %843 = vmatpush1.xpose.msra.mxu0 0.0
    %844 = vmatprep.subr.mxu0 0.0
    %845 = vmatpush1.xpose.msra.mxu0 0.0
    %846 = vmatprep.subr.mxu0 0.0
    %847 = vmatpush1.xpose.msra.mxu0 0.0
    %848 = vmatprep.subr.mxu0 0.0
    %849 = vmatpush1.xpose.msra.mxu0 0.0
    %850 = vmatprep.subr.mxu0 0.0
    %851 = vmatpush1.xpose.msra.mxu0 0.0
    %852 = vmatprep.subr.mxu0 0.0
    %853 = vmatpush1.xpose.msra.mxu0 0.0
    %854 = vmatprep.subr.mxu0 0.0
    %855 = vmatpush1.xpose.msra.mxu0 0.0
    %856 = vmatprep.subr.mxu0 0.0
    %857 = vmatpush1.xpose.msra.mxu0 0.0
    %858 = vmatprep.subr.mxu0 0.0
    %859 = vmatpush1.xpose.msra.mxu0 0.0
    %v860 = vand.u32 %v236, 4294901760
    %861 = vmatprep.subr.mxu0 %v860
    %v862 = vand.u32 %v234, 4294901760
    %863 = vmatpush1.xpose.msra.mxu0 %v862
    %v864 = vand.u32 %v232, 4294901760
    %865 = vmatprep.subr.mxu0 %v864
    %v866 = vand.u32 %v230, 4294901760
    %867 = vmatpush1.xpose.msra.mxu0 %v866
    %868 = vmatprep.subr.mxu0 0.0
    %869 = vmatpush2.xpose.msra.mxu0 0.0
    %870 = vmatprep.subr.mxu0 0.0
    %871 = vmatpush2.xpose.msra.mxu0 0.0
    %872 = vmatprep.subr.mxu0 0.0
    %873 = vmatpush2.xpose.msra.mxu0 0.0
    %874 = vmatprep.subr.mxu0 0.0
    %875 = vmatpush2.xpose.msra.mxu0 0.0
    %876 = vmatprep.subr.mxu0 0.0
    %877 = vmatpush2.xpose.msra.mxu0 0.0
    %878 = vmatprep.subr.mxu0 0.0
    %879 = vmatpush2.xpose.msra.mxu0 0.0
    %880 = vmatprep.subr.mxu0 0.0
    %881 = vmatpush2.xpose.msra.mxu0 0.0
    %882 = vmatprep.subr.mxu0 0.0
    %883 = vmatpush2.xpose.msra.mxu0 0.0
    %884 = vmatprep.subr.mxu0 0.0
    %885 = vmatpush2.xpose.msra.mxu0 0.0
    %886 = vmatprep.subr.mxu0 0.0
    %887 = vmatpush2.xpose.msra.mxu0 0.0
    %888 = vmatprep.subr.mxu0 0.0
    %889 = vmatpush2.xpose.msra.mxu0 0.0
    %890 = vmatprep.subr.mxu0 0.0
    %891 = vmatpush2.xpose.msra.mxu0 0.0
    %892 = vmatprep.subr.mxu0 0.0
    %893 = vmatpush2.xpose.msra.mxu0 0.0
    %894 = vmatprep.subr.mxu0 0.0
    %895 = vmatpush2.xpose.msra.mxu0 0.0
    %896 = vmatprep.subr.mxu0 0.0
    %897 = vmatpush2.xpose.msra.mxu0 0.0
    %898 = vmatprep.subr.mxu0 0.0
    %899 = vmatpush2.xpose.msra.mxu0 0.0
    %v900 = vand.u32 %v327, 4294901760
    %v901 = vsub.f32 %v327, %v900
    %v902 = vand.u32 %v901, 4294901760
    %v903 = vsub.f32 %v901, %v902
    %v904 = vand.u32 %v903, 4294901760
    %905 = vmatprep.mubr.f32.mxu0 %v904
    %v906 = vand.u32 %v326, 4294901760
    %v907 = vsub.f32 %v326, %v906
    %v908 = vand.u32 %v907, 4294901760
    %v909 = vsub.f32 %v907, %v908
    %v910 = vand.u32 %v909, 4294901760
    %911 = vmatmul.mubr.f32.gmra.mxu0 %v910
    %v912 = vpop.f32.mrf.mxu0
    %v913 = vadd.f32 %v829, %v912
    %v914 = vpop.f32.mrf.mxu0
    %915 = vdwg.mxu0
    %916 = vmatprep.subr.mxu0 0.0
    %917 = vmatpush1.xpose.msra.mxu0 0.0
    %918 = vmatprep.subr.mxu0 0.0
    %919 = vmatpush1.xpose.msra.mxu0 0.0
    %920 = vmatprep.subr.mxu0 0.0
    %921 = vmatpush1.xpose.msra.mxu0 0.0
    %922 = vmatprep.subr.mxu0 0.0
    %923 = vmatpush1.xpose.msra.mxu0 0.0
    %924 = vmatprep.subr.mxu0 0.0
    %925 = vmatpush1.xpose.msra.mxu0 0.0
    %926 = vmatprep.subr.mxu0 0.0
    %927 = vmatpush1.xpose.msra.mxu0 0.0
    %928 = vmatprep.subr.mxu0 0.0
    %929 = vmatpush1.xpose.msra.mxu0 0.0
    %930 = vmatprep.subr.mxu0 0.0
    %931 = vmatpush1.xpose.msra.mxu0 0.0
    %932 = vmatprep.subr.mxu0 0.0
    %933 = vmatpush1.xpose.msra.mxu0 0.0
    %934 = vmatprep.subr.mxu0 0.0
    %935 = vmatpush1.xpose.msra.mxu0 0.0
    %936 = vmatprep.subr.mxu0 0.0
    %937 = vmatpush1.xpose.msra.mxu0 0.0
    %938 = vmatprep.subr.mxu0 0.0
    %939 = vmatpush1.xpose.msra.mxu0 0.0
    %940 = vmatprep.subr.mxu0 0.0
    %941 = vmatpush1.xpose.msra.mxu0 0.0
    %942 = vmatprep.subr.mxu0 0.0
    %943 = vmatpush1.xpose.msra.mxu0 0.0
    %v944 = vand.u32 %v236, 4294901760
    %v945 = vsub.f32 %v236, %v944
    %v946 = vand.u32 %v945, 4294901760
    %v947 = vsub.f32 %v945, %v946
    %v948 = vand.u32 %v947, 4294901760
    %949 = vmatprep.subr.mxu0 %v948
    %v950 = vand.u32 %v234, 4294901760
    %v951 = vsub.f32 %v234, %v950
    %v952 = vand.u32 %v951, 4294901760
    %v953 = vsub.f32 %v951, %v952
    %v954 = vand.u32 %v953, 4294901760
    %955 = vmatpush1.xpose.msra.mxu0 %v954
    %v956 = vand.u32 %v232, 4294901760
    %v957 = vsub.f32 %v232, %v956
    %v958 = vand.u32 %v957, 4294901760
    %v959 = vsub.f32 %v957, %v958
    %v960 = vand.u32 %v959, 4294901760
    %961 = vmatprep.subr.mxu0 %v960
    %v962 = vand.u32 %v230, 4294901760
    %v963 = vsub.f32 %v230, %v962
    %v964 = vand.u32 %v963, 4294901760
    %v965 = vsub.f32 %v963, %v964
    %v966 = vand.u32 %v965, 4294901760
    %967 = vmatpush1.xpose.msra.mxu0 %v966
    %968 = vmatprep.subr.mxu0 0.0
    %969 = vmatpush2.xpose.msra.mxu0 0.0
    %970 = vmatprep.subr.mxu0 0.0
    %971 = vmatpush2.xpose.msra.mxu0 0.0
    %972 = vmatprep.subr.mxu0 0.0
    %973 = vmatpush2.xpose.msra.mxu0 0.0
    %974 = vmatprep.subr.mxu0 0.0
    %975 = vmatpush2.xpose.msra.mxu0 0.0
    %976 = vmatprep.subr.mxu0 0.0
    %977 = vmatpush2.xpose.msra.mxu0 0.0
    %978 = vmatprep.subr.mxu0 0.0
    %979 = vmatpush2.xpose.msra.mxu0 0.0
    %980 = vmatprep.subr.mxu0 0.0
    %981 = vmatpush2.xpose.msra.mxu0 0.0
    %982 = vmatprep.subr.mxu0 0.0
    %983 = vmatpush2.xpose.msra.mxu0 0.0
    %984 = vmatprep.subr.mxu0 0.0
    %985 = vmatpush2.xpose.msra.mxu0 0.0
    %986 = vmatprep.subr.mxu0 0.0
    %987 = vmatpush2.xpose.msra.mxu0 0.0
    %988 = vmatprep.subr.mxu0 0.0
    %989 = vmatpush2.xpose.msra.mxu0 0.0
    %990 = vmatprep.subr.mxu0 0.0
    %991 = vmatpush2.xpose.msra.mxu0 0.0
    %992 = vmatprep.subr.mxu0 0.0
    %993 = vmatpush2.xpose.msra.mxu0 0.0
    %994 = vmatprep.subr.mxu0 0.0
    %995 = vmatpush2.xpose.msra.mxu0 0.0
    %996 = vmatprep.subr.mxu0 0.0
    %997 = vmatpush2.xpose.msra.mxu0 0.0
    %998 = vmatprep.subr.mxu0 0.0
    %999 = vmatpush2.xpose.msra.mxu0 0.0
    %v1000 = vand.u32 %v327, 4294901760
    %1001 = vmatprep.mubr.f32.mxu0 %v1000
    %v1002 = vand.u32 %v326, 4294901760
    %1003 = vmatmul.mubr.f32.gmra.mxu0 %v1002
    %v1004 = vpop.f32.mrf.mxu0
    %v1005 = vadd.f32 %v913, %v1004
    %v1006 = vpop.f32.mrf.mxu0
    %1007 = vdwg.mxu0
    %1008 = vmatprep.subr.mxu0 0.0
    %1009 = vmatpush1.xpose.msra.mxu0 0.0
    %1010 = vmatprep.subr.mxu0 0.0
    %1011 = vmatpush1.xpose.msra.mxu0 0.0
    %1012 = vmatprep.subr.mxu0 0.0
    %1013 = vmatpush1.xpose.msra.mxu0 0.0
    %1014 = vmatprep.subr.mxu0 0.0
    %1015 = vmatpush1.xpose.msra.mxu0 0.0
    %1016 = vmatprep.subr.mxu0 0.0
    %1017 = vmatpush1.xpose.msra.mxu0 0.0
    %1018 = vmatprep.subr.mxu0 0.0
    %1019 = vmatpush1.xpose.msra.mxu0 0.0
    %1020 = vmatprep.subr.mxu0 0.0
    %1021 = vmatpush1.xpose.msra.mxu0 0.0
    %1022 = vmatprep.subr.mxu0 0.0
    %1023 = vmatpush1.xpose.msra.mxu0 0.0
    %1024 = vmatprep.subr.mxu0 0.0
    %1025 = vmatpush1.xpose.msra.mxu0 0.0
    %1026 = vmatprep.subr.mxu0 0.0
    %1027 = vmatpush1.xpose.msra.mxu0 0.0
    %1028 = vmatprep.subr.mxu0 0.0
    %1029 = vmatpush1.xpose.msra.mxu0 0.0
    %1030 = vmatprep.subr.mxu0 0.0
    %1031 = vmatpush1.xpose.msra.mxu0 0.0
    %1032 = vmatprep.subr.mxu0 0.0
    %1033 = vmatpush1.xpose.msra.mxu0 0.0
    %1034 = vmatprep.subr.mxu0 0.0
    %1035 = vmatpush1.xpose.msra.mxu0 0.0
    %v1036 = vand.u32 %v236, 4294901760
    %v1037 = vsub.f32 %v236, %v1036
    %1038 = vmatprep.subr.mxu0 %v1037
    %v1039 = vand.u32 %v234, 4294901760
    %v1040 = vsub.f32 %v234, %v1039
    %1041 = vmatpush1.xpose.msra.mxu0 %v1040
    %v1042 = vand.u32 %v232, 4294901760
    %v1043 = vsub.f32 %v232, %v1042
    %1044 = vmatprep.subr.mxu0 %v1043
    %v1045 = vand.u32 %v230, 4294901760
    %v1046 = vsub.f32 %v230, %v1045
    %1047 = vmatpush1.xpose.msra.mxu0 %v1046
    %1048 = vmatprep.subr.mxu0 0.0
    %1049 = vmatpush2.xpose.msra.mxu0 0.0
    %1050 = vmatprep.subr.mxu0 0.0
    %1051 = vmatpush2.xpose.msra.mxu0 0.0
    %1052 = vmatprep.subr.mxu0 0.0
    %1053 = vmatpush2.xpose.msra.mxu0 0.0
    %1054 = vmatprep.subr.mxu0 0.0
    %1055 = vmatpush2.xpose.msra.mxu0 0.0
    %1056 = vmatprep.subr.mxu0 0.0
    %1057 = vmatpush2.xpose.msra.mxu0 0.0
    %1058 = vmatprep.subr.mxu0 0.0
    %1059 = vmatpush2.xpose.msra.mxu0 0.0
    %1060 = vmatprep.subr.mxu0 0.0
    %1061 = vmatpush2.xpose.msra.mxu0 0.0
    %1062 = vmatprep.subr.mxu0 0.0
    %1063 = vmatpush2.xpose.msra.mxu0 0.0
    %1064 = vmatprep.subr.mxu0 0.0
    %1065 = vmatpush2.xpose.msra.mxu0 0.0
    %1066 = vmatprep.subr.mxu0 0.0
    %1067 = vmatpush2.xpose.msra.mxu0 0.0
    %1068 = vmatprep.subr.mxu0 0.0
    %1069 = vmatpush2.xpose.msra.mxu0 0.0
    %1070 = vmatprep.subr.mxu0 0.0
    %1071 = vmatpush2.xpose.msra.mxu0 0.0
    %1072 = vmatprep.subr.mxu0 0.0
    %1073 = vmatpush2.xpose.msra.mxu0 0.0
    %1074 = vmatprep.subr.mxu0 0.0
    %1075 = vmatpush2.xpose.msra.mxu0 0.0
    %1076 = vmatprep.subr.mxu0 0.0
    %1077 = vmatpush2.xpose.msra.mxu0 0.0
    %1078 = vmatprep.subr.mxu0 0.0
    %1079 = vmatpush2.xpose.msra.mxu0 0.0
    %v1080 = vand.u32 %v327, 4294901760
    %v1081 = vsub.f32 %v327, %v1080
    %1082 = vmatprep.mubr.f32.mxu0 %v1081
    %v1083 = vand.u32 %v326, 4294901760
    %v1084 = vsub.f32 %v326, %v1083
    %1085 = vmatmul.mubr.f32.gmra.mxu0 %v1084
    %v1086 = vpop.f32.mrf.mxu0
    %v1087 = vadd.f32 %v1005, %v1086
    %v1088 = vpop.f32.mrf.mxu0
    %1089 = vdwg.mxu0
    %1090 = vmatprep.subr.mxu0 0.0
    %1091 = vmatpush1.xpose.msra.mxu0 0.0
    %1092 = vmatprep.subr.mxu0 0.0
    %1093 = vmatpush1.xpose.msra.mxu0 0.0
    %1094 = vmatprep.subr.mxu0 0.0
    %1095 = vmatpush1.xpose.msra.mxu0 0.0
    %1096 = vmatprep.subr.mxu0 0.0
    %1097 = vmatpush1.xpose.msra.mxu0 0.0
    %1098 = vmatprep.subr.mxu0 0.0
    %1099 = vmatpush1.xpose.msra.mxu0 0.0
    %1100 = vmatprep.subr.mxu0 0.0
    %1101 = vmatpush1.xpose.msra.mxu0 0.0
    %1102 = vmatprep.subr.mxu0 0.0
    %1103 = vmatpush1.xpose.msra.mxu0 0.0
    %1104 = vmatprep.subr.mxu0 0.0
    %1105 = vmatpush1.xpose.msra.mxu0 0.0
    %1106 = vmatprep.subr.mxu0 0.0
    %1107 = vmatpush1.xpose.msra.mxu0 0.0
    %1108 = vmatprep.subr.mxu0 0.0
    %1109 = vmatpush1.xpose.msra.mxu0 0.0
    %1110 = vmatprep.subr.mxu0 0.0
    %1111 = vmatpush1.xpose.msra.mxu0 0.0
    %1112 = vmatprep.subr.mxu0 0.0
    %1113 = vmatpush1.xpose.msra.mxu0 0.0
    %1114 = vmatprep.subr.mxu0 0.0
    %1115 = vmatpush1.xpose.msra.mxu0 0.0
    %1116 = vmatprep.subr.mxu0 0.0
    %1117 = vmatpush1.xpose.msra.mxu0 0.0
    %v1118 = vand.u32 %v236, 4294901760
    %1119 = vmatprep.subr.mxu0 %v1118
    %v1120 = vand.u32 %v234, 4294901760
    %1121 = vmatpush1.xpose.msra.mxu0 %v1120
    %v1122 = vand.u32 %v232, 4294901760
    %1123 = vmatprep.subr.mxu0 %v1122
    %v1124 = vand.u32 %v230, 4294901760
    %1125 = vmatpush1.xpose.msra.mxu0 %v1124
    %1126 = vmatprep.subr.mxu0 0.0
    %1127 = vmatpush2.xpose.msra.mxu0 0.0
    %1128 = vmatprep.subr.mxu0 0.0
    %1129 = vmatpush2.xpose.msra.mxu0 0.0
    %1130 = vmatprep.subr.mxu0 0.0
    %1131 = vmatpush2.xpose.msra.mxu0 0.0
    %1132 = vmatprep.subr.mxu0 0.0
    %1133 = vmatpush2.xpose.msra.mxu0 0.0
    %1134 = vmatprep.subr.mxu0 0.0
    %1135 = vmatpush2.xpose.msra.mxu0 0.0
    %1136 = vmatprep.subr.mxu0 0.0
    %1137 = vmatpush2.xpose.msra.mxu0 0.0
    %1138 = vmatprep.subr.mxu0 0.0
    %1139 = vmatpush2.xpose.msra.mxu0 0.0
    %1140 = vmatprep.subr.mxu0 0.0
    %1141 = vmatpush2.xpose.msra.mxu0 0.0
    %1142 = vmatprep.subr.mxu0 0.0
    %1143 = vmatpush2.xpose.msra.mxu0 0.0
    %1144 = vmatprep.subr.mxu0 0.0
    %1145 = vmatpush2.xpose.msra.mxu0 0.0
    %1146 = vmatprep.subr.mxu0 0.0
    %1147 = vmatpush2.xpose.msra.mxu0 0.0
    %1148 = vmatprep.subr.mxu0 0.0
    %1149 = vmatpush2.xpose.msra.mxu0 0.0
    %1150 = vmatprep.subr.mxu0 0.0
    %1151 = vmatpush2.xpose.msra.mxu0 0.0
    %1152 = vmatprep.subr.mxu0 0.0
    %1153 = vmatpush2.xpose.msra.mxu0 0.0
    %1154 = vmatprep.subr.mxu0 0.0
    %1155 = vmatpush2.xpose.msra.mxu0 0.0
    %1156 = vmatprep.subr.mxu0 0.0
    %1157 = vmatpush2.xpose.msra.mxu0 0.0
    %v1158 = vand.u32 %v327, 4294901760
    %v1159 = vsub.f32 %v327, %v1158
    %v1160 = vand.u32 %v1159, 4294901760
    %1161 = vmatprep.mubr.f32.mxu0 %v1160
    %v1162 = vand.u32 %v326, 4294901760
    %v1163 = vsub.f32 %v326, %v1162
    %v1164 = vand.u32 %v1163, 4294901760
    %1165 = vmatmul.mubr.f32.gmra.mxu0 %v1164
    %v1166 = vpop.f32.mrf.mxu0
    %v1167 = vadd.f32 %v1087, %v1166
    %v1168 = vpop.f32.mrf.mxu0
    %1169 = vdwg.mxu0
    %1170 = vmatprep.subr.mxu0 0.0
    %1171 = vmatpush1.xpose.msra.mxu0 0.0
    %1172 = vmatprep.subr.mxu0 0.0
    %1173 = vmatpush1.xpose.msra.mxu0 0.0
    %1174 = vmatprep.subr.mxu0 0.0
    %1175 = vmatpush1.xpose.msra.mxu0 0.0
    %1176 = vmatprep.subr.mxu0 0.0
    %1177 = vmatpush1.xpose.msra.mxu0 0.0
    %1178 = vmatprep.subr.mxu0 0.0
    %1179 = vmatpush1.xpose.msra.mxu0 0.0
    %1180 = vmatprep.subr.mxu0 0.0
    %1181 = vmatpush1.xpose.msra.mxu0 0.0
    %1182 = vmatprep.subr.mxu0 0.0
    %1183 = vmatpush1.xpose.msra.mxu0 0.0
    %1184 = vmatprep.subr.mxu0 0.0
    %1185 = vmatpush1.xpose.msra.mxu0 0.0
    %1186 = vmatprep.subr.mxu0 0.0
    %1187 = vmatpush1.xpose.msra.mxu0 0.0
    %1188 = vmatprep.subr.mxu0 0.0
    %1189 = vmatpush1.xpose.msra.mxu0 0.0
    %1190 = vmatprep.subr.mxu0 0.0
    %1191 = vmatpush1.xpose.msra.mxu0 0.0
    %1192 = vmatprep.subr.mxu0 0.0
    %1193 = vmatpush1.xpose.msra.mxu0 0.0
    %1194 = vmatprep.subr.mxu0 0.0
    %1195 = vmatpush1.xpose.msra.mxu0 0.0
    %1196 = vmatprep.subr.mxu0 0.0
    %1197 = vmatpush1.xpose.msra.mxu0 0.0
    %v1198 = vand.u32 %v236, 4294901760
    %v1199 = vsub.f32 %v236, %v1198
    %v1200 = vand.u32 %v1199, 4294901760
    %1201 = vmatprep.subr.mxu0 %v1200
    %v1202 = vand.u32 %v234, 4294901760
    %v1203 = vsub.f32 %v234, %v1202
    %v1204 = vand.u32 %v1203, 4294901760
    %1205 = vmatpush1.xpose.msra.mxu0 %v1204
    %v1206 = vand.u32 %v232, 4294901760
    %v1207 = vsub.f32 %v232, %v1206
    %v1208 = vand.u32 %v1207, 4294901760
    %1209 = vmatprep.subr.mxu0 %v1208
    %v1210 = vand.u32 %v230, 4294901760
    %v1211 = vsub.f32 %v230, %v1210
    %v1212 = vand.u32 %v1211, 4294901760
    %1213 = vmatpush1.xpose.msra.mxu0 %v1212
    %1214 = vmatprep.subr.mxu0 0.0
    %1215 = vmatpush2.xpose.msra.mxu0 0.0
    %1216 = vmatprep.subr.mxu0 0.0
    %1217 = vmatpush2.xpose.msra.mxu0 0.0
    %1218 = vmatprep.subr.mxu0 0.0
    %1219 = vmatpush2.xpose.msra.mxu0 0.0
    %1220 = vmatprep.subr.mxu0 0.0
    %1221 = vmatpush2.xpose.msra.mxu0 0.0
    %1222 = vmatprep.subr.mxu0 0.0
    %1223 = vmatpush2.xpose.msra.mxu0 0.0
    %1224 = vmatprep.subr.mxu0 0.0
    %1225 = vmatpush2.xpose.msra.mxu0 0.0
    %1226 = vmatprep.subr.mxu0 0.0
    %1227 = vmatpush2.xpose.msra.mxu0 0.0
    %1228 = vmatprep.subr.mxu0 0.0
    %1229 = vmatpush2.xpose.msra.mxu0 0.0
    %1230 = vmatprep.subr.mxu0 0.0
    %1231 = vmatpush2.xpose.msra.mxu0 0.0
    %1232 = vmatprep.subr.mxu0 0.0
    %1233 = vmatpush2.xpose.msra.mxu0 0.0
    %1234 = vmatprep.subr.mxu0 0.0
    %1235 = vmatpush2.xpose.msra.mxu0 0.0
    %1236 = vmatprep.subr.mxu0 0.0
    %1237 = vmatpush2.xpose.msra.mxu0 0.0
    %1238 = vmatprep.subr.mxu0 0.0
    %1239 = vmatpush2.xpose.msra.mxu0 0.0
    %1240 = vmatprep.subr.mxu0 0.0
    %1241 = vmatpush2.xpose.msra.mxu0 0.0
    %1242 = vmatprep.subr.mxu0 0.0
    %1243 = vmatpush2.xpose.msra.mxu0 0.0
    %1244 = vmatprep.subr.mxu0 0.0
    %1245 = vmatpush2.xpose.msra.mxu0 0.0
    %v1246 = vand.u32 %v327, 4294901760
    %1247 = vmatprep.mubr.f32.mxu0 %v1246
    %v1248 = vand.u32 %v326, 4294901760
    %1249 = vmatmul.mubr.f32.gmra.mxu0 %v1248
    %v1250 = vpop.f32.mrf.mxu0
    %v1251 = vadd.f32 %v1167, %v1250
    %v1252 = vpop.f32.mrf.mxu0
    %1253 = vdwg.mxu0
    %1254 = vmatprep.subr.mxu0 0.0
    %1255 = vmatpush1.xpose.msra.mxu0 0.0
    %1256 = vmatprep.subr.mxu0 0.0
    %1257 = vmatpush1.xpose.msra.mxu0 0.0
    %1258 = vmatprep.subr.mxu0 0.0
    %1259 = vmatpush1.xpose.msra.mxu0 0.0
    %1260 = vmatprep.subr.mxu0 0.0
    %1261 = vmatpush1.xpose.msra.mxu0 0.0
    %1262 = vmatprep.subr.mxu0 0.0
    %1263 = vmatpush1.xpose.msra.mxu0 0.0
    %1264 = vmatprep.subr.mxu0 0.0
    %1265 = vmatpush1.xpose.msra.mxu0 0.0
    %1266 = vmatprep.subr.mxu0 0.0
    %1267 = vmatpush1.xpose.msra.mxu0 0.0
    %1268 = vmatprep.subr.mxu0 0.0
    %1269 = vmatpush1.xpose.msra.mxu0 0.0
    %1270 = vmatprep.subr.mxu0 0.0
    %1271 = vmatpush1.xpose.msra.mxu0 0.0
    %1272 = vmatprep.subr.mxu0 0.0
    %1273 = vmatpush1.xpose.msra.mxu0 0.0
    %1274 = vmatprep.subr.mxu0 0.0
    %1275 = vmatpush1.xpose.msra.mxu0 0.0
    %1276 = vmatprep.subr.mxu0 0.0
    %1277 = vmatpush1.xpose.msra.mxu0 0.0
    %1278 = vmatprep.subr.mxu0 0.0
    %1279 = vmatpush1.xpose.msra.mxu0 0.0
    %1280 = vmatprep.subr.mxu0 0.0
    %1281 = vmatpush1.xpose.msra.mxu0 0.0
    %v1282 = vand.u32 %v236, 4294901760
    %1283 = vmatprep.subr.mxu0 %v1282
    %v1284 = vand.u32 %v234, 4294901760
    %1285 = vmatpush1.xpose.msra.mxu0 %v1284
    %v1286 = vand.u32 %v232, 4294901760
    %1287 = vmatprep.subr.mxu0 %v1286
    %v1288 = vand.u32 %v230, 4294901760
    %1289 = vmatpush1.xpose.msra.mxu0 %v1288
    %1290 = vmatprep.subr.mxu0 0.0
    %1291 = vmatpush2.xpose.msra.mxu0 0.0
    %1292 = vmatprep.subr.mxu0 0.0
    %1293 = vmatpush2.xpose.msra.mxu0 0.0
    %1294 = vmatprep.subr.mxu0 0.0
    %1295 = vmatpush2.xpose.msra.mxu0 0.0
    %1296 = vmatprep.subr.mxu0 0.0
    %1297 = vmatpush2.xpose.msra.mxu0 0.0
    %1298 = vmatprep.subr.mxu0 0.0
    %1299 = vmatpush2.xpose.msra.mxu0 0.0
    %1300 = vmatprep.subr.mxu0 0.0
    %1301 = vmatpush2.xpose.msra.mxu0 0.0
    %1302 = vmatprep.subr.mxu0 0.0
    %1303 = vmatpush2.xpose.msra.mxu0 0.0
    %1304 = vmatprep.subr.mxu0 0.0
    %1305 = vmatpush2.xpose.msra.mxu0 0.0
    %1306 = vmatprep.subr.mxu0 0.0
    %1307 = vmatpush2.xpose.msra.mxu0 0.0
    %1308 = vmatprep.subr.mxu0 0.0
    %1309 = vmatpush2.xpose.msra.mxu0 0.0
    %1310 = vmatprep.subr.mxu0 0.0
    %1311 = vmatpush2.xpose.msra.mxu0 0.0
    %1312 = vmatprep.subr.mxu0 0.0
    %1313 = vmatpush2.xpose.msra.mxu0 0.0
    %1314 = vmatprep.subr.mxu0 0.0
    %1315 = vmatpush2.xpose.msra.mxu0 0.0
    %1316 = vmatprep.subr.mxu0 0.0
    %1317 = vmatpush2.xpose.msra.mxu0 0.0
    %1318 = vmatprep.subr.mxu0 0.0
    %1319 = vmatpush2.xpose.msra.mxu0 0.0
    %1320 = vmatprep.subr.mxu0 0.0
    %1321 = vmatpush2.xpose.msra.mxu0 0.0
    %v1322 = vand.u32 %v327, 4294901760
    %1323 = vmatprep.mubr.f32.mxu0 %v1322
    %v1324 = vand.u32 %v326, 4294901760
    %1325 = vmatmul.mubr.f32.gmra.mxu0 %v1324
    %v1326 = vpop.f32.mrf.mxu0
    %v1327 = vadd.f32 %v1251, %v1326
    %v1328 = vpop.f32.mrf.mxu0
    %1329 = vdwg.mxu0
    %1330 = vmatprep.subr.mxu0 0.0
    %1331 = vmatpush1.xpose.msra.mxu0 0.0
    %1332 = vmatprep.subr.mxu0 0.0
    %1333 = vmatpush1.xpose.msra.mxu0 0.0
    %1334 = vmatprep.subr.mxu0 0.0
    %1335 = vmatpush1.xpose.msra.mxu0 0.0
    %1336 = vmatprep.subr.mxu0 0.0
    %1337 = vmatpush1.xpose.msra.mxu0 0.0
    %1338 = vmatprep.subr.mxu0 0.0
    %1339 = vmatpush1.xpose.msra.mxu0 0.0
    %1340 = vmatprep.subr.mxu0 0.0
    %1341 = vmatpush1.xpose.msra.mxu0 0.0
    %1342 = vmatprep.subr.mxu0 0.0
    %1343 = vmatpush1.xpose.msra.mxu0 0.0
    %1344 = vmatprep.subr.mxu0 0.0
    %1345 = vmatpush1.xpose.msra.mxu0 0.0
    %1346 = vmatprep.subr.mxu0 0.0
    %1347 = vmatpush1.xpose.msra.mxu0 0.0
    %1348 = vmatprep.subr.mxu0 0.0
    %1349 = vmatpush1.xpose.msra.mxu0 0.0
    %1350 = vmatprep.subr.mxu0 0.0
    %1351 = vmatpush1.xpose.msra.mxu0 0.0
    %1352 = vmatprep.subr.mxu0 0.0
    %1353 = vmatpush1.xpose.msra.mxu0 0.0
    %1354 = vmatprep.subr.mxu0 0.0
    %1355 = vmatpush1.xpose.msra.mxu0 0.0
    %1356 = vmatprep.subr.mxu0 0.0
    %1357 = vmatpush1.xpose.msra.mxu0 0.0
    %v1358 = vand.u32 %v279, 4294901760
    %1359 = vmatprep.subr.mxu0 %v1358
    %v1360 = vand.u32 %v277, 4294901760
    %1361 = vmatpush1.xpose.msra.mxu0 %v1360
    %v1362 = vand.u32 %v275, 4294901760
    %1363 = vmatprep.subr.mxu0 %v1362
    %v1364 = vand.u32 %v273, 4294901760
    %1365 = vmatpush1.xpose.msra.mxu0 %v1364
    %1366 = vmatprep.subr.mxu0 0.0
    %1367 = vmatpush2.xpose.msra.mxu0 0.0
    %1368 = vmatprep.subr.mxu0 0.0
    %1369 = vmatpush2.xpose.msra.mxu0 0.0
    %1370 = vmatprep.subr.mxu0 0.0
    %1371 = vmatpush2.xpose.msra.mxu0 0.0
    %1372 = vmatprep.subr.mxu0 0.0
    %1373 = vmatpush2.xpose.msra.mxu0 0.0
    %1374 = vmatprep.subr.mxu0 0.0
    %1375 = vmatpush2.xpose.msra.mxu0 0.0
    %1376 = vmatprep.subr.mxu0 0.0
    %1377 = vmatpush2.xpose.msra.mxu0 0.0
    %1378 = vmatprep.subr.mxu0 0.0
    %1379 = vmatpush2.xpose.msra.mxu0 0.0
    %1380 = vmatprep.subr.mxu0 0.0
    %1381 = vmatpush2.xpose.msra.mxu0 0.0
    %1382 = vmatprep.subr.mxu0 0.0
    %1383 = vmatpush2.xpose.msra.mxu0 0.0
    %1384 = vmatprep.subr.mxu0 0.0
    %1385 = vmatpush2.xpose.msra.mxu0 0.0
    %1386 = vmatprep.subr.mxu0 0.0
    %1387 = vmatpush2.xpose.msra.mxu0 0.0
    %1388 = vmatprep.subr.mxu0 0.0
    %1389 = vmatpush2.xpose.msra.mxu0 0.0
    %1390 = vmatprep.subr.mxu0 0.0
    %1391 = vmatpush2.xpose.msra.mxu0 0.0
    %1392 = vmatprep.subr.mxu0 0.0
    %1393 = vmatpush2.xpose.msra.mxu0 0.0
    %1394 = vmatprep.subr.mxu0 0.0
    %1395 = vmatpush2.xpose.msra.mxu0 0.0
    %1396 = vmatprep.subr.mxu0 0.0
    %1397 = vmatpush2.xpose.msra.mxu0 0.0
    %v1398 = vand.u32 %v329, 4294901760
    %v1399 = vsub.f32 %v329, %v1398
    %v1400 = vand.u32 %v1399, 4294901760
    %v1401 = vsub.f32 %v1399, %v1400
    %v1402 = vand.u32 %v1401, 4294901760
    %1403 = vmatprep.mubr.f32.mxu0 %v1402
    %v1404 = vand.u32 %v328, 4294901760
    %v1405 = vsub.f32 %v328, %v1404
    %v1406 = vand.u32 %v1405, 4294901760
    %v1407 = vsub.f32 %v1405, %v1406
    %v1408 = vand.u32 %v1407, 4294901760
    %1409 = vmatmul.mubr.f32.gmra.mxu0 %v1408
    %v1410 = vpop.f32.mrf.mxu0
    %v1411 = vadd.f32 %v1327, %v1410
    %v1412 = vpop.f32.mrf.mxu0
    %1413 = vdwg.mxu0
    %1414 = vmatprep.subr.mxu0 0.0
    %1415 = vmatpush1.xpose.msra.mxu0 0.0
    %1416 = vmatprep.subr.mxu0 0.0
    %1417 = vmatpush1.xpose.msra.mxu0 0.0
    %1418 = vmatprep.subr.mxu0 0.0
    %1419 = vmatpush1.xpose.msra.mxu0 0.0
    %1420 = vmatprep.subr.mxu0 0.0
    %1421 = vmatpush1.xpose.msra.mxu0 0.0
    %1422 = vmatprep.subr.mxu0 0.0
    %1423 = vmatpush1.xpose.msra.mxu0 0.0
    %1424 = vmatprep.subr.mxu0 0.0
    %1425 = vmatpush1.xpose.msra.mxu0 0.0
    %1426 = vmatprep.subr.mxu0 0.0
    %1427 = vmatpush1.xpose.msra.mxu0 0.0
    %1428 = vmatprep.subr.mxu0 0.0
    %1429 = vmatpush1.xpose.msra.mxu0 0.0
    %1430 = vmatprep.subr.mxu0 0.0
    %1431 = vmatpush1.xpose.msra.mxu0 0.0
    %1432 = vmatprep.subr.mxu0 0.0
    %1433 = vmatpush1.xpose.msra.mxu0 0.0
    %1434 = vmatprep.subr.mxu0 0.0
    %1435 = vmatpush1.xpose.msra.mxu0 0.0
    %1436 = vmatprep.subr.mxu0 0.0
    %1437 = vmatpush1.xpose.msra.mxu0 0.0
    %1438 = vmatprep.subr.mxu0 0.0
    %1439 = vmatpush1.xpose.msra.mxu0 0.0
    %1440 = vmatprep.subr.mxu0 0.0
    %1441 = vmatpush1.xpose.msra.mxu0 0.0
    %v1442 = vand.u32 %v279, 4294901760
    %v1443 = vsub.f32 %v279, %v1442
    %v1444 = vand.u32 %v1443, 4294901760
    %v1445 = vsub.f32 %v1443, %v1444
    %v1446 = vand.u32 %v1445, 4294901760
    %1447 = vmatprep.subr.mxu0 %v1446
    %v1448 = vand.u32 %v277, 4294901760
    %v1449 = vsub.f32 %v277, %v1448
    %v1450 = vand.u32 %v1449, 4294901760
    %v1451 = vsub.f32 %v1449, %v1450
    %v1452 = vand.u32 %v1451, 4294901760
    %1453 = vmatpush1.xpose.msra.mxu0 %v1452
    %v1454 = vand.u32 %v275, 4294901760
    %v1455 = vsub.f32 %v275, %v1454
    %v1456 = vand.u32 %v1455, 4294901760
    %v1457 = vsub.f32 %v1455, %v1456
    %v1458 = vand.u32 %v1457, 4294901760
    %1459 = vmatprep.subr.mxu0 %v1458
    %v1460 = vand.u32 %v273, 4294901760
    %v1461 = vsub.f32 %v273, %v1460
    %v1462 = vand.u32 %v1461, 4294901760
    %v1463 = vsub.f32 %v1461, %v1462
    %v1464 = vand.u32 %v1463, 4294901760
    %1465 = vmatpush1.xpose.msra.mxu0 %v1464
    %1466 = vmatprep.subr.mxu0 0.0
    %1467 = vmatpush2.xpose.msra.mxu0 0.0
    %1468 = vmatprep.subr.mxu0 0.0
    %1469 = vmatpush2.xpose.msra.mxu0 0.0
    %1470 = vmatprep.subr.mxu0 0.0
    %1471 = vmatpush2.xpose.msra.mxu0 0.0
    %1472 = vmatprep.subr.mxu0 0.0
    %1473 = vmatpush2.xpose.msra.mxu0 0.0
    %1474 = vmatprep.subr.mxu0 0.0
    %1475 = vmatpush2.xpose.msra.mxu0 0.0
    %1476 = vmatprep.subr.mxu0 0.0
    %1477 = vmatpush2.xpose.msra.mxu0 0.0
    %1478 = vmatprep.subr.mxu0 0.0
    %1479 = vmatpush2.xpose.msra.mxu0 0.0
    %1480 = vmatprep.subr.mxu0 0.0
    %1481 = vmatpush2.xpose.msra.mxu0 0.0
    %1482 = vmatprep.subr.mxu0 0.0
    %1483 = vmatpush2.xpose.msra.mxu0 0.0
    %1484 = vmatprep.subr.mxu0 0.0
    %1485 = vmatpush2.xpose.msra.mxu0 0.0
    %1486 = vmatprep.subr.mxu0 0.0
    %1487 = vmatpush2.xpose.msra.mxu0 0.0
    %1488 = vmatprep.subr.mxu0 0.0
    %1489 = vmatpush2.xpose.msra.mxu0 0.0
    %1490 = vmatprep.subr.mxu0 0.0
    %1491 = vmatpush2.xpose.msra.mxu0 0.0
    %1492 = vmatprep.subr.mxu0 0.0
    %1493 = vmatpush2.xpose.msra.mxu0 0.0
    %1494 = vmatprep.subr.mxu0 0.0
    %1495 = vmatpush2.xpose.msra.mxu0 0.0
    %1496 = vmatprep.subr.mxu0 0.0
    %1497 = vmatpush2.xpose.msra.mxu0 0.0
    %v1498 = vand.u32 %v329, 4294901760
    %1499 = vmatprep.mubr.f32.mxu0 %v1498
    %v1500 = vand.u32 %v328, 4294901760
    %1501 = vmatmul.mubr.f32.gmra.mxu0 %v1500
    %v1502 = vpop.f32.mrf.mxu0
    %v1503 = vadd.f32 %v1411, %v1502
    %v1504 = vpop.f32.mrf.mxu0
    %1505 = vdwg.mxu0
    %1506 = vmatprep.subr.mxu0 0.0
    %1507 = vmatpush1.xpose.msra.mxu0 0.0
    %1508 = vmatprep.subr.mxu0 0.0
    %1509 = vmatpush1.xpose.msra.mxu0 0.0
    %1510 = vmatprep.subr.mxu0 0.0
    %1511 = vmatpush1.xpose.msra.mxu0 0.0
    %1512 = vmatprep.subr.mxu0 0.0
    %1513 = vmatpush1.xpose.msra.mxu0 0.0
    %1514 = vmatprep.subr.mxu0 0.0
    %1515 = vmatpush1.xpose.msra.mxu0 0.0
    %1516 = vmatprep.subr.mxu0 0.0
    %1517 = vmatpush1.xpose.msra.mxu0 0.0
    %1518 = vmatprep.subr.mxu0 0.0
    %1519 = vmatpush1.xpose.msra.mxu0 0.0
    %1520 = vmatprep.subr.mxu0 0.0
    %1521 = vmatpush1.xpose.msra.mxu0 0.0
    %1522 = vmatprep.subr.mxu0 0.0
    %1523 = vmatpush1.xpose.msra.mxu0 0.0
    %1524 = vmatprep.subr.mxu0 0.0
    %1525 = vmatpush1.xpose.msra.mxu0 0.0
    %1526 = vmatprep.subr.mxu0 0.0
    %1527 = vmatpush1.xpose.msra.mxu0 0.0
    %1528 = vmatprep.subr.mxu0 0.0
    %1529 = vmatpush1.xpose.msra.mxu0 0.0
    %1530 = vmatprep.subr.mxu0 0.0
    %1531 = vmatpush1.xpose.msra.mxu0 0.0
    %1532 = vmatprep.subr.mxu0 0.0
    %1533 = vmatpush1.xpose.msra.mxu0 0.0
    %v1534 = vand.u32 %v279, 4294901760
    %v1535 = vsub.f32 %v279, %v1534
    %1536 = vmatprep.subr.mxu0 %v1535
    %v1537 = vand.u32 %v277, 4294901760
    %v1538 = vsub.f32 %v277, %v1537
    %1539 = vmatpush1.xpose.msra.mxu0 %v1538
    %v1540 = vand.u32 %v275, 4294901760
    %v1541 = vsub.f32 %v275, %v1540
    %1542 = vmatprep.subr.mxu0 %v1541
    %v1543 = vand.u32 %v273, 4294901760
    %v1544 = vsub.f32 %v273, %v1543
    %1545 = vmatpush1.xpose.msra.mxu0 %v1544
    %1546 = vmatprep.subr.mxu0 0.0
    %1547 = vmatpush2.xpose.msra.mxu0 0.0
    %1548 = vmatprep.subr.mxu0 0.0
    %1549 = vmatpush2.xpose.msra.mxu0 0.0
    %1550 = vmatprep.subr.mxu0 0.0
    %1551 = vmatpush2.xpose.msra.mxu0 0.0
    %1552 = vmatprep.subr.mxu0 0.0
    %1553 = vmatpush2.xpose.msra.mxu0 0.0
    %1554 = vmatprep.subr.mxu0 0.0
    %1555 = vmatpush2.xpose.msra.mxu0 0.0
    %1556 = vmatprep.subr.mxu0 0.0
    %1557 = vmatpush2.xpose.msra.mxu0 0.0
    %1558 = vmatprep.subr.mxu0 0.0
    %1559 = vmatpush2.xpose.msra.mxu0 0.0
    %1560 = vmatprep.subr.mxu0 0.0
    %1561 = vmatpush2.xpose.msra.mxu0 0.0
    %1562 = vmatprep.subr.mxu0 0.0
    %1563 = vmatpush2.xpose.msra.mxu0 0.0
    %1564 = vmatprep.subr.mxu0 0.0
    %1565 = vmatpush2.xpose.msra.mxu0 0.0
    %1566 = vmatprep.subr.mxu0 0.0
    %1567 = vmatpush2.xpose.msra.mxu0 0.0
    %1568 = vmatprep.subr.mxu0 0.0
    %1569 = vmatpush2.xpose.msra.mxu0 0.0
    %1570 = vmatprep.subr.mxu0 0.0
    %1571 = vmatpush2.xpose.msra.mxu0 0.0
    %1572 = vmatprep.subr.mxu0 0.0
    %1573 = vmatpush2.xpose.msra.mxu0 0.0
    %1574 = vmatprep.subr.mxu0 0.0
    %1575 = vmatpush2.xpose.msra.mxu0 0.0
    %1576 = vmatprep.subr.mxu0 0.0
    %1577 = vmatpush2.xpose.msra.mxu0 0.0
    %v1578 = vand.u32 %v329, 4294901760
    %v1579 = vsub.f32 %v329, %v1578
    %1580 = vmatprep.mubr.f32.mxu0 %v1579
    %v1581 = vand.u32 %v328, 4294901760
    %v1582 = vsub.f32 %v328, %v1581
    %1583 = vmatmul.mubr.f32.gmra.mxu0 %v1582
    %v1584 = vpop.f32.mrf.mxu0
    %v1585 = vadd.f32 %v1503, %v1584
    %v1586 = vpop.f32.mrf.mxu0
    %1587 = vdwg.mxu0
    %1588 = vmatprep.subr.mxu0 0.0
    %1589 = vmatpush1.xpose.msra.mxu0 0.0
    %1590 = vmatprep.subr.mxu0 0.0
    %1591 = vmatpush1.xpose.msra.mxu0 0.0
    %1592 = vmatprep.subr.mxu0 0.0
    %1593 = vmatpush1.xpose.msra.mxu0 0.0
    %1594 = vmatprep.subr.mxu0 0.0
    %1595 = vmatpush1.xpose.msra.mxu0 0.0
    %1596 = vmatprep.subr.mxu0 0.0
    %1597 = vmatpush1.xpose.msra.mxu0 0.0
    %1598 = vmatprep.subr.mxu0 0.0
    %1599 = vmatpush1.xpose.msra.mxu0 0.0
    %1600 = vmatprep.subr.mxu0 0.0
    %1601 = vmatpush1.xpose.msra.mxu0 0.0
    %1602 = vmatprep.subr.mxu0 0.0
    %1603 = vmatpush1.xpose.msra.mxu0 0.0
    %1604 = vmatprep.subr.mxu0 0.0
    %1605 = vmatpush1.xpose.msra.mxu0 0.0
    %1606 = vmatprep.subr.mxu0 0.0
    %1607 = vmatpush1.xpose.msra.mxu0 0.0
    %1608 = vmatprep.subr.mxu0 0.0
    %1609 = vmatpush1.xpose.msra.mxu0 0.0
    %1610 = vmatprep.subr.mxu0 0.0
    %1611 = vmatpush1.xpose.msra.mxu0 0.0
    %1612 = vmatprep.subr.mxu0 0.0
    %1613 = vmatpush1.xpose.msra.mxu0 0.0
    %1614 = vmatprep.subr.mxu0 0.0
    %1615 = vmatpush1.xpose.msra.mxu0 0.0
    %v1616 = vand.u32 %v279, 4294901760
    %1617 = vmatprep.subr.mxu0 %v1616
    %v1618 = vand.u32 %v277, 4294901760
    %1619 = vmatpush1.xpose.msra.mxu0 %v1618
    %v1620 = vand.u32 %v275, 4294901760
    %1621 = vmatprep.subr.mxu0 %v1620
    %v1622 = vand.u32 %v273, 4294901760
    %1623 = vmatpush1.xpose.msra.mxu0 %v1622
    %1624 = vmatprep.subr.mxu0 0.0
    %1625 = vmatpush2.xpose.msra.mxu0 0.0
    %1626 = vmatprep.subr.mxu0 0.0
    %1627 = vmatpush2.xpose.msra.mxu0 0.0
    %1628 = vmatprep.subr.mxu0 0.0
    %1629 = vmatpush2.xpose.msra.mxu0 0.0
    %1630 = vmatprep.subr.mxu0 0.0
    %1631 = vmatpush2.xpose.msra.mxu0 0.0
    %1632 = vmatprep.subr.mxu0 0.0
    %1633 = vmatpush2.xpose.msra.mxu0 0.0
    %1634 = vmatprep.subr.mxu0 0.0
    %1635 = vmatpush2.xpose.msra.mxu0 0.0
    %1636 = vmatprep.subr.mxu0 0.0
    %1637 = vmatpush2.xpose.msra.mxu0 0.0
    %1638 = vmatprep.subr.mxu0 0.0
    %1639 = vmatpush2.xpose.msra.mxu0 0.0
    %1640 = vmatprep.subr.mxu0 0.0
    %1641 = vmatpush2.xpose.msra.mxu0 0.0
    %1642 = vmatprep.subr.mxu0 0.0
    %1643 = vmatpush2.xpose.msra.mxu0 0.0
    %1644 = vmatprep.subr.mxu0 0.0
    %1645 = vmatpush2.xpose.msra.mxu0 0.0
    %1646 = vmatprep.subr.mxu0 0.0
    %1647 = vmatpush2.xpose.msra.mxu0 0.0
    %1648 = vmatprep.subr.mxu0 0.0
    %1649 = vmatpush2.xpose.msra.mxu0 0.0
    %1650 = vmatprep.subr.mxu0 0.0
    %1651 = vmatpush2.xpose.msra.mxu0 0.0
    %1652 = vmatprep.subr.mxu0 0.0
    %1653 = vmatpush2.xpose.msra.mxu0 0.0
    %1654 = vmatprep.subr.mxu0 0.0
    %1655 = vmatpush2.xpose.msra.mxu0 0.0
    %v1656 = vand.u32 %v329, 4294901760
    %v1657 = vsub.f32 %v329, %v1656
    %v1658 = vand.u32 %v1657, 4294901760
    %1659 = vmatprep.mubr.f32.mxu0 %v1658
    %v1660 = vand.u32 %v328, 4294901760
    %v1661 = vsub.f32 %v328, %v1660
    %v1662 = vand.u32 %v1661, 4294901760
    %1663 = vmatmul.mubr.f32.gmra.mxu0 %v1662
    %v1664 = vpop.f32.mrf.mxu0
    %v1665 = vadd.f32 %v1585, %v1664
    %v1666 = vpop.f32.mrf.mxu0
    %1667 = vdwg.mxu0
    %1668 = vmatprep.subr.mxu0 0.0
    %1669 = vmatpush1.xpose.msra.mxu0 0.0
    %1670 = vmatprep.subr.mxu0 0.0
    %1671 = vmatpush1.xpose.msra.mxu0 0.0
    %1672 = vmatprep.subr.mxu0 0.0
    %1673 = vmatpush1.xpose.msra.mxu0 0.0
    %1674 = vmatprep.subr.mxu0 0.0
    %1675 = vmatpush1.xpose.msra.mxu0 0.0
    %1676 = vmatprep.subr.mxu0 0.0
    %1677 = vmatpush1.xpose.msra.mxu0 0.0
    %1678 = vmatprep.subr.mxu0 0.0
    %1679 = vmatpush1.xpose.msra.mxu0 0.0
    %1680 = vmatprep.subr.mxu0 0.0
    %1681 = vmatpush1.xpose.msra.mxu0 0.0
    %1682 = vmatprep.subr.mxu0 0.0
    %1683 = vmatpush1.xpose.msra.mxu0 0.0
    %1684 = vmatprep.subr.mxu0 0.0
    %1685 = vmatpush1.xpose.msra.mxu0 0.0
    %1686 = vmatprep.subr.mxu0 0.0
    %1687 = vmatpush1.xpose.msra.mxu0 0.0
    %1688 = vmatprep.subr.mxu0 0.0
    %1689 = vmatpush1.xpose.msra.mxu0 0.0
    %1690 = vmatprep.subr.mxu0 0.0
    %1691 = vmatpush1.xpose.msra.mxu0 0.0
    %1692 = vmatprep.subr.mxu0 0.0
    %1693 = vmatpush1.xpose.msra.mxu0 0.0
    %1694 = vmatprep.subr.mxu0 0.0
    %1695 = vmatpush1.xpose.msra.mxu0 0.0
    %v1696 = vand.u32 %v279, 4294901760
    %v1697 = vsub.f32 %v279, %v1696
    %v1698 = vand.u32 %v1697, 4294901760
    %1699 = vmatprep.subr.mxu0 %v1698
    %v1700 = vand.u32 %v277, 4294901760
    %v1701 = vsub.f32 %v277, %v1700
    %v1702 = vand.u32 %v1701, 4294901760
    %1703 = vmatpush1.xpose.msra.mxu0 %v1702
    %v1704 = vand.u32 %v275, 4294901760
    %v1705 = vsub.f32 %v275, %v1704
    %v1706 = vand.u32 %v1705, 4294901760
    %1707 = vmatprep.subr.mxu0 %v1706
    %v1708 = vand.u32 %v273, 4294901760
    %v1709 = vsub.f32 %v273, %v1708
    %v1710 = vand.u32 %v1709, 4294901760
    %1711 = vmatpush1.xpose.msra.mxu0 %v1710
    %1712 = vmatprep.subr.mxu0 0.0
    %1713 = vmatpush2.xpose.msra.mxu0 0.0
    %1714 = vmatprep.subr.mxu0 0.0
    %1715 = vmatpush2.xpose.msra.mxu0 0.0
    %1716 = vmatprep.subr.mxu0 0.0
    %1717 = vmatpush2.xpose.msra.mxu0 0.0
    %1718 = vmatprep.subr.mxu0 0.0
    %1719 = vmatpush2.xpose.msra.mxu0 0.0
    %1720 = vmatprep.subr.mxu0 0.0
    %1721 = vmatpush2.xpose.msra.mxu0 0.0
    %1722 = vmatprep.subr.mxu0 0.0
    %1723 = vmatpush2.xpose.msra.mxu0 0.0
    %1724 = vmatprep.subr.mxu0 0.0
    %1725 = vmatpush2.xpose.msra.mxu0 0.0
    %1726 = vmatprep.subr.mxu0 0.0
    %1727 = vmatpush2.xpose.msra.mxu0 0.0
    %1728 = vmatprep.subr.mxu0 0.0
    %1729 = vmatpush2.xpose.msra.mxu0 0.0
    %1730 = vmatprep.subr.mxu0 0.0
    %1731 = vmatpush2.xpose.msra.mxu0 0.0
    %1732 = vmatprep.subr.mxu0 0.0
    %1733 = vmatpush2.xpose.msra.mxu0 0.0
    %1734 = vmatprep.subr.mxu0 0.0
    %1735 = vmatpush2.xpose.msra.mxu0 0.0
    %1736 = vmatprep.subr.mxu0 0.0
    %1737 = vmatpush2.xpose.msra.mxu0 0.0
    %1738 = vmatprep.subr.mxu0 0.0
    %1739 = vmatpush2.xpose.msra.mxu0 0.0
    %1740 = vmatprep.subr.mxu0 0.0
    %1741 = vmatpush2.xpose.msra.mxu0 0.0
    %1742 = vmatprep.subr.mxu0 0.0
    %1743 = vmatpush2.xpose.msra.mxu0 0.0
    %v1744 = vand.u32 %v329, 4294901760
    %1745 = vmatprep.mubr.f32.mxu0 %v1744
    %v1746 = vand.u32 %v328, 4294901760
    %1747 = vmatmul.mubr.f32.gmra.mxu0 %v1746
    %v1748 = vpop.f32.mrf.mxu0
    %v1749 = vadd.f32 %v1665, %v1748
    %v1750 = vpop.f32.mrf.mxu0
    %1751 = vdwg.mxu0
    %1752 = vmatprep.subr.mxu0 0.0
    %1753 = vmatpush1.xpose.msra.mxu0 0.0
    %1754 = vmatprep.subr.mxu0 0.0
    %1755 = vmatpush1.xpose.msra.mxu0 0.0
    %1756 = vmatprep.subr.mxu0 0.0
    %1757 = vmatpush1.xpose.msra.mxu0 0.0
    %1758 = vmatprep.subr.mxu0 0.0
    %1759 = vmatpush1.xpose.msra.mxu0 0.0
    %1760 = vmatprep.subr.mxu0 0.0
    %1761 = vmatpush1.xpose.msra.mxu0 0.0
    %1762 = vmatprep.subr.mxu0 0.0
    %1763 = vmatpush1.xpose.msra.mxu0 0.0
    %1764 = vmatprep.subr.mxu0 0.0
    %1765 = vmatpush1.xpose.msra.mxu0 0.0
    %1766 = vmatprep.subr.mxu0 0.0
    %1767 = vmatpush1.xpose.msra.mxu0 0.0
    %1768 = vmatprep.subr.mxu0 0.0
    %1769 = vmatpush1.xpose.msra.mxu0 0.0
    %1770 = vmatprep.subr.mxu0 0.0
    %1771 = vmatpush1.xpose.msra.mxu0 0.0
    %1772 = vmatprep.subr.mxu0 0.0
    %1773 = vmatpush1.xpose.msra.mxu0 0.0
    %1774 = vmatprep.subr.mxu0 0.0
    %1775 = vmatpush1.xpose.msra.mxu0 0.0
    %1776 = vmatprep.subr.mxu0 0.0
    %1777 = vmatpush1.xpose.msra.mxu0 0.0
    %1778 = vmatprep.subr.mxu0 0.0
    %1779 = vmatpush1.xpose.msra.mxu0 0.0
    %v1780 = vand.u32 %v279, 4294901760
    %1781 = vmatprep.subr.mxu0 %v1780
    %v1782 = vand.u32 %v277, 4294901760
    %1783 = vmatpush1.xpose.msra.mxu0 %v1782
    %v1784 = vand.u32 %v275, 4294901760
    %1785 = vmatprep.subr.mxu0 %v1784
    %v1786 = vand.u32 %v273, 4294901760
    %1787 = vmatpush1.xpose.msra.mxu0 %v1786
    %1788 = vmatprep.subr.mxu0 0.0
    %1789 = vmatpush2.xpose.msra.mxu0 0.0
    %1790 = vmatprep.subr.mxu0 0.0
    %1791 = vmatpush2.xpose.msra.mxu0 0.0
    %1792 = vmatprep.subr.mxu0 0.0
    %1793 = vmatpush2.xpose.msra.mxu0 0.0
    %1794 = vmatprep.subr.mxu0 0.0
    %1795 = vmatpush2.xpose.msra.mxu0 0.0
    %1796 = vmatprep.subr.mxu0 0.0
    %1797 = vmatpush2.xpose.msra.mxu0 0.0
    %1798 = vmatprep.subr.mxu0 0.0
    %1799 = vmatpush2.xpose.msra.mxu0 0.0
    %1800 = vmatprep.subr.mxu0 0.0
    %1801 = vmatpush2.xpose.msra.mxu0 0.0
    %1802 = vmatprep.subr.mxu0 0.0
    %1803 = vmatpush2.xpose.msra.mxu0 0.0
    %1804 = vmatprep.subr.mxu0 0.0
    %1805 = vmatpush2.xpose.msra.mxu0 0.0
    %1806 = vmatprep.subr.mxu0 0.0
    %1807 = vmatpush2.xpose.msra.mxu0 0.0
    %1808 = vmatprep.subr.mxu0 0.0
    %1809 = vmatpush2.xpose.msra.mxu0 0.0
    %1810 = vmatprep.subr.mxu0 0.0
    %1811 = vmatpush2.xpose.msra.mxu0 0.0
    %1812 = vmatprep.subr.mxu0 0.0
    %1813 = vmatpush2.xpose.msra.mxu0 0.0
    %1814 = vmatprep.subr.mxu0 0.0
    %1815 = vmatpush2.xpose.msra.mxu0 0.0
    %1816 = vmatprep.subr.mxu0 0.0
    %1817 = vmatpush2.xpose.msra.mxu0 0.0
    %1818 = vmatprep.subr.mxu0 0.0
    %1819 = vmatpush2.xpose.msra.mxu0 0.0
    %v1820 = vand.u32 %v329, 4294901760
    %1821 = vmatprep.mubr.f32.mxu0 %v1820
    %v1822 = vand.u32 %v328, 4294901760
    %1823 = vmatmul.mubr.f32.gmra.mxu0 %v1822
    %v1824 = vpop.f32.mrf.mxu0
    %v1825 = vadd.f32 %v1749, %v1824
    %v1826 = vpop.f32.mrf.mxu0
    %1827 = vdwg.mxu0
    %1828 = vmatprep.subr.mxu0 0.0
    %1829 = vmatpush1.xpose.msra.mxu0 0.0
    %1830 = vmatprep.subr.mxu0 0.0
    %1831 = vmatpush1.xpose.msra.mxu0 0.0
    %1832 = vmatprep.subr.mxu0 0.0
    %1833 = vmatpush1.xpose.msra.mxu0 0.0
    %1834 = vmatprep.subr.mxu0 0.0
    %1835 = vmatpush1.xpose.msra.mxu0 0.0
    %1836 = vmatprep.subr.mxu0 0.0
    %1837 = vmatpush1.xpose.msra.mxu0 0.0
    %1838 = vmatprep.subr.mxu0 0.0
    %1839 = vmatpush1.xpose.msra.mxu0 0.0
    %1840 = vmatprep.subr.mxu0 0.0
    %1841 = vmatpush1.xpose.msra.mxu0 0.0
    %1842 = vmatprep.subr.mxu0 0.0
    %1843 = vmatpush1.xpose.msra.mxu0 0.0
    %1844 = vmatprep.subr.mxu0 0.0
    %1845 = vmatpush1.xpose.msra.mxu0 0.0
    %1846 = vmatprep.subr.mxu0 0.0
    %1847 = vmatpush1.xpose.msra.mxu0 0.0
    %1848 = vmatprep.subr.mxu0 0.0
    %1849 = vmatpush1.xpose.msra.mxu0 0.0
    %1850 = vmatprep.subr.mxu0 0.0
    %1851 = vmatpush1.xpose.msra.mxu0 0.0
    %1852 = vmatprep.subr.mxu0 0.0
    %1853 = vmatpush1.xpose.msra.mxu0 0.0
    %1854 = vmatprep.subr.mxu0 0.0
    %1855 = vmatpush1.xpose.msra.mxu0 0.0
    %v1856 = vand.u32 %v322, 4294901760
    %1857 = vmatprep.subr.mxu0 %v1856
    %v1858 = vand.u32 %v320, 4294901760
    %1859 = vmatpush1.xpose.msra.mxu0 %v1858
    %v1860 = vand.u32 %v318, 4294901760
    %1861 = vmatprep.subr.mxu0 %v1860
    %v1862 = vand.u32 %v316, 4294901760
    %1863 = vmatpush1.xpose.msra.mxu0 %v1862
    %1864 = vmatprep.subr.mxu0 0.0
    %1865 = vmatpush2.xpose.msra.mxu0 0.0
    %1866 = vmatprep.subr.mxu0 0.0
    %1867 = vmatpush2.xpose.msra.mxu0 0.0
    %1868 = vmatprep.subr.mxu0 0.0
    %1869 = vmatpush2.xpose.msra.mxu0 0.0
    %1870 = vmatprep.subr.mxu0 0.0
    %1871 = vmatpush2.xpose.msra.mxu0 0.0
    %1872 = vmatprep.subr.mxu0 0.0
    %1873 = vmatpush2.xpose.msra.mxu0 0.0
    %1874 = vmatprep.subr.mxu0 0.0
    %1875 = vmatpush2.xpose.msra.mxu0 0.0
    %1876 = vmatprep.subr.mxu0 0.0
    %1877 = vmatpush2.xpose.msra.mxu0 0.0
    %1878 = vmatprep.subr.mxu0 0.0
    %1879 = vmatpush2.xpose.msra.mxu0 0.0
    %1880 = vmatprep.subr.mxu0 0.0
    %1881 = vmatpush2.xpose.msra.mxu0 0.0
    %1882 = vmatprep.subr.mxu0 0.0
    %1883 = vmatpush2.xpose.msra.mxu0 0.0
    %1884 = vmatprep.subr.mxu0 0.0
    %1885 = vmatpush2.xpose.msra.mxu0 0.0
    %1886 = vmatprep.subr.mxu0 0.0
    %1887 = vmatpush2.xpose.msra.mxu0 0.0
    %1888 = vmatprep.subr.mxu0 0.0
    %1889 = vmatpush2.xpose.msra.mxu0 0.0
    %1890 = vmatprep.subr.mxu0 0.0
    %1891 = vmatpush2.xpose.msra.mxu0 0.0
    %1892 = vmatprep.subr.mxu0 0.0
    %1893 = vmatpush2.xpose.msra.mxu0 0.0
    %1894 = vmatprep.subr.mxu0 0.0
    %1895 = vmatpush2.xpose.msra.mxu0 0.0
    %v1896 = vand.u32 %v331, 4294901760
    %v1897 = vsub.f32 %v331, %v1896
    %v1898 = vand.u32 %v1897, 4294901760
    %v1899 = vsub.f32 %v1897, %v1898
    %v1900 = vand.u32 %v1899, 4294901760
    %1901 = vmatprep.mubr.f32.mxu0 %v1900
    %v1902 = vand.u32 %v330, 4294901760
    %v1903 = vsub.f32 %v330, %v1902
    %v1904 = vand.u32 %v1903, 4294901760
    %v1905 = vsub.f32 %v1903, %v1904
    %v1906 = vand.u32 %v1905, 4294901760
    %1907 = vmatmul.mubr.f32.gmra.mxu0 %v1906
    %v1908 = vpop.f32.mrf.mxu0
    %v1909 = vadd.f32 %v1825, %v1908
    %v1910 = vpop.f32.mrf.mxu0
    %1911 = vdwg.mxu0
    %1912 = vmatprep.subr.mxu0 0.0
    %1913 = vmatpush1.xpose.msra.mxu0 0.0
    %1914 = vmatprep.subr.mxu0 0.0
    %1915 = vmatpush1.xpose.msra.mxu0 0.0
    %1916 = vmatprep.subr.mxu0 0.0
    %1917 = vmatpush1.xpose.msra.mxu0 0.0
    %1918 = vmatprep.subr.mxu0 0.0
    %1919 = vmatpush1.xpose.msra.mxu0 0.0
    %1920 = vmatprep.subr.mxu0 0.0
    %1921 = vmatpush1.xpose.msra.mxu0 0.0
    %1922 = vmatprep.subr.mxu0 0.0
    %1923 = vmatpush1.xpose.msra.mxu0 0.0
    %1924 = vmatprep.subr.mxu0 0.0
    %1925 = vmatpush1.xpose.msra.mxu0 0.0
    %1926 = vmatprep.subr.mxu0 0.0
    %1927 = vmatpush1.xpose.msra.mxu0 0.0
    %1928 = vmatprep.subr.mxu0 0.0
    %1929 = vmatpush1.xpose.msra.mxu0 0.0
    %1930 = vmatprep.subr.mxu0 0.0
    %1931 = vmatpush1.xpose.msra.mxu0 0.0
    %1932 = vmatprep.subr.mxu0 0.0
    %1933 = vmatpush1.xpose.msra.mxu0 0.0
    %1934 = vmatprep.subr.mxu0 0.0
    %1935 = vmatpush1.xpose.msra.mxu0 0.0
    %1936 = vmatprep.subr.mxu0 0.0
    %1937 = vmatpush1.xpose.msra.mxu0 0.0
    %1938 = vmatprep.subr.mxu0 0.0
    %1939 = vmatpush1.xpose.msra.mxu0 0.0
    %v1940 = vand.u32 %v322, 4294901760
    %v1941 = vsub.f32 %v322, %v1940
    %v1942 = vand.u32 %v1941, 4294901760
    %v1943 = vsub.f32 %v1941, %v1942
    %v1944 = vand.u32 %v1943, 4294901760
    %1945 = vmatprep.subr.mxu0 %v1944
    %v1946 = vand.u32 %v320, 4294901760
    %v1947 = vsub.f32 %v320, %v1946
    %v1948 = vand.u32 %v1947, 4294901760
    %v1949 = vsub.f32 %v1947, %v1948
    %v1950 = vand.u32 %v1949, 4294901760
    %1951 = vmatpush1.xpose.msra.mxu0 %v1950
    %v1952 = vand.u32 %v318, 4294901760
    %v1953 = vsub.f32 %v318, %v1952
    %v1954 = vand.u32 %v1953, 4294901760
    %v1955 = vsub.f32 %v1953, %v1954
    %v1956 = vand.u32 %v1955, 4294901760
    %1957 = vmatprep.subr.mxu0 %v1956
    %v1958 = vand.u32 %v316, 4294901760
    %v1959 = vsub.f32 %v316, %v1958
    %v1960 = vand.u32 %v1959, 4294901760
    %v1961 = vsub.f32 %v1959, %v1960
    %v1962 = vand.u32 %v1961, 4294901760
    %1963 = vmatpush1.xpose.msra.mxu0 %v1962
    %1964 = vmatprep.subr.mxu0 0.0
    %1965 = vmatpush2.xpose.msra.mxu0 0.0
    %1966 = vmatprep.subr.mxu0 0.0
    %1967 = vmatpush2.xpose.msra.mxu0 0.0
    %1968 = vmatprep.subr.mxu0 0.0
    %1969 = vmatpush2.xpose.msra.mxu0 0.0
    %1970 = vmatprep.subr.mxu0 0.0
    %1971 = vmatpush2.xpose.msra.mxu0 0.0
    %1972 = vmatprep.subr.mxu0 0.0
    %1973 = vmatpush2.xpose.msra.mxu0 0.0
    %1974 = vmatprep.subr.mxu0 0.0
    %1975 = vmatpush2.xpose.msra.mxu0 0.0
    %1976 = vmatprep.subr.mxu0 0.0
    %1977 = vmatpush2.xpose.msra.mxu0 0.0
    %1978 = vmatprep.subr.mxu0 0.0
    %1979 = vmatpush2.xpose.msra.mxu0 0.0
    %1980 = vmatprep.subr.mxu0 0.0
    %1981 = vmatpush2.xpose.msra.mxu0 0.0
    %1982 = vmatprep.subr.mxu0 0.0
    %1983 = vmatpush2.xpose.msra.mxu0 0.0
    %1984 = vmatprep.subr.mxu0 0.0
    %1985 = vmatpush2.xpose.msra.mxu0 0.0
    %1986 = vmatprep.subr.mxu0 0.0
    %1987 = vmatpush2.xpose.msra.mxu0 0.0
    %1988 = vmatprep.subr.mxu0 0.0
    %1989 = vmatpush2.xpose.msra.mxu0 0.0
    %1990 = vmatprep.subr.mxu0 0.0
    %1991 = vmatpush2.xpose.msra.mxu0 0.0
    %1992 = vmatprep.subr.mxu0 0.0
    %1993 = vmatpush2.xpose.msra.mxu0 0.0
    %1994 = vmatprep.subr.mxu0 0.0
    %1995 = vmatpush2.xpose.msra.mxu0 0.0
    %v1996 = vand.u32 %v331, 4294901760
    %1997 = vmatprep.mubr.f32.mxu0 %v1996
    %v1998 = vand.u32 %v330, 4294901760
    %1999 = vmatmul.mubr.f32.gmra.mxu0 %v1998
    %v2000 = vpop.f32.mrf.mxu0
    %v2001 = vadd.f32 %v1909, %v2000
    %v2002 = vpop.f32.mrf.mxu0
    %2003 = vdwg.mxu0
    %2004 = vmatprep.subr.mxu0 0.0
    %2005 = vmatpush1.xpose.msra.mxu0 0.0
    %2006 = vmatprep.subr.mxu0 0.0
    %2007 = vmatpush1.xpose.msra.mxu0 0.0
    %2008 = vmatprep.subr.mxu0 0.0
    %2009 = vmatpush1.xpose.msra.mxu0 0.0
    %2010 = vmatprep.subr.mxu0 0.0
    %2011 = vmatpush1.xpose.msra.mxu0 0.0
    %2012 = vmatprep.subr.mxu0 0.0
    %2013 = vmatpush1.xpose.msra.mxu0 0.0
    %2014 = vmatprep.subr.mxu0 0.0
    %2015 = vmatpush1.xpose.msra.mxu0 0.0
    %2016 = vmatprep.subr.mxu0 0.0
    %2017 = vmatpush1.xpose.msra.mxu0 0.0
    %2018 = vmatprep.subr.mxu0 0.0
    %2019 = vmatpush1.xpose.msra.mxu0 0.0
    %2020 = vmatprep.subr.mxu0 0.0
    %2021 = vmatpush1.xpose.msra.mxu0 0.0
    %2022 = vmatprep.subr.mxu0 0.0
    %2023 = vmatpush1.xpose.msra.mxu0 0.0
    %2024 = vmatprep.subr.mxu0 0.0
    %2025 = vmatpush1.xpose.msra.mxu0 0.0
    %2026 = vmatprep.subr.mxu0 0.0
    %2027 = vmatpush1.xpose.msra.mxu0 0.0
    %2028 = vmatprep.subr.mxu0 0.0
    %2029 = vmatpush1.xpose.msra.mxu0 0.0
    %2030 = vmatprep.subr.mxu0 0.0
    %2031 = vmatpush1.xpose.msra.mxu0 0.0
    %v2032 = vand.u32 %v322, 4294901760
    %v2033 = vsub.f32 %v322, %v2032
    %2034 = vmatprep.subr.mxu0 %v2033
    %v2035 = vand.u32 %v320, 4294901760
    %v2036 = vsub.f32 %v320, %v2035
    %2037 = vmatpush1.xpose.msra.mxu0 %v2036
    %v2038 = vand.u32 %v318, 4294901760
    %v2039 = vsub.f32 %v318, %v2038
    %2040 = vmatprep.subr.mxu0 %v2039
    %v2041 = vand.u32 %v316, 4294901760
    %v2042 = vsub.f32 %v316, %v2041
    %2043 = vmatpush1.xpose.msra.mxu0 %v2042
    %2044 = vmatprep.subr.mxu0 0.0
    %2045 = vmatpush2.xpose.msra.mxu0 0.0
    %2046 = vmatprep.subr.mxu0 0.0
    %2047 = vmatpush2.xpose.msra.mxu0 0.0
    %2048 = vmatprep.subr.mxu0 0.0
    %2049 = vmatpush2.xpose.msra.mxu0 0.0
    %2050 = vmatprep.subr.mxu0 0.0
    %2051 = vmatpush2.xpose.msra.mxu0 0.0
    %2052 = vmatprep.subr.mxu0 0.0
    %2053 = vmatpush2.xpose.msra.mxu0 0.0
    %2054 = vmatprep.subr.mxu0 0.0
    %2055 = vmatpush2.xpose.msra.mxu0 0.0
    %2056 = vmatprep.subr.mxu0 0.0
    %2057 = vmatpush2.xpose.msra.mxu0 0.0
    %2058 = vmatprep.subr.mxu0 0.0
    %2059 = vmatpush2.xpose.msra.mxu0 0.0
    %2060 = vmatprep.subr.mxu0 0.0
    %2061 = vmatpush2.xpose.msra.mxu0 0.0
    %2062 = vmatprep.subr.mxu0 0.0
    %2063 = vmatpush2.xpose.msra.mxu0 0.0
    %2064 = vmatprep.subr.mxu0 0.0
    %2065 = vmatpush2.xpose.msra.mxu0 0.0
    %2066 = vmatprep.subr.mxu0 0.0
    %2067 = vmatpush2.xpose.msra.mxu0 0.0
    %2068 = vmatprep.subr.mxu0 0.0
    %2069 = vmatpush2.xpose.msra.mxu0 0.0
    %2070 = vmatprep.subr.mxu0 0.0
    %2071 = vmatpush2.xpose.msra.mxu0 0.0
    %2072 = vmatprep.subr.mxu0 0.0
    %2073 = vmatpush2.xpose.msra.mxu0 0.0
    %2074 = vmatprep.subr.mxu0 0.0
    %2075 = vmatpush2.xpose.msra.mxu0 0.0
    %v2076 = vand.u32 %v331, 4294901760
    %v2077 = vsub.f32 %v331, %v2076
    %2078 = vmatprep.mubr.f32.mxu0 %v2077
    %v2079 = vand.u32 %v330, 4294901760
    %v2080 = vsub.f32 %v330, %v2079
    %2081 = vmatmul.mubr.f32.gmra.mxu0 %v2080
    %v2082 = vpop.f32.mrf.mxu0
    %v2083 = vadd.f32 %v2001, %v2082
    %v2084 = vpop.f32.mrf.mxu0
    %2085 = vdwg.mxu0
    %2086 = vmatprep.subr.mxu0 0.0
    %2087 = vmatpush1.xpose.msra.mxu0 0.0
    %2088 = vmatprep.subr.mxu0 0.0
    %2089 = vmatpush1.xpose.msra.mxu0 0.0
    %2090 = vmatprep.subr.mxu0 0.0
    %2091 = vmatpush1.xpose.msra.mxu0 0.0
    %2092 = vmatprep.subr.mxu0 0.0
    %2093 = vmatpush1.xpose.msra.mxu0 0.0
    %2094 = vmatprep.subr.mxu0 0.0
    %2095 = vmatpush1.xpose.msra.mxu0 0.0
    %2096 = vmatprep.subr.mxu0 0.0
    %2097 = vmatpush1.xpose.msra.mxu0 0.0
    %2098 = vmatprep.subr.mxu0 0.0
    %2099 = vmatpush1.xpose.msra.mxu0 0.0
    %2100 = vmatprep.subr.mxu0 0.0
    %2101 = vmatpush1.xpose.msra.mxu0 0.0
    %2102 = vmatprep.subr.mxu0 0.0
    %2103 = vmatpush1.xpose.msra.mxu0 0.0
    %2104 = vmatprep.subr.mxu0 0.0
    %2105 = vmatpush1.xpose.msra.mxu0 0.0
    %2106 = vmatprep.subr.mxu0 0.0
    %2107 = vmatpush1.xpose.msra.mxu0 0.0
    %2108 = vmatprep.subr.mxu0 0.0
    %2109 = vmatpush1.xpose.msra.mxu0 0.0
    %2110 = vmatprep.subr.mxu0 0.0
    %2111 = vmatpush1.xpose.msra.mxu0 0.0
    %2112 = vmatprep.subr.mxu0 0.0
    %2113 = vmatpush1.xpose.msra.mxu0 0.0
    %v2114 = vand.u32 %v322, 4294901760
    %2115 = vmatprep.subr.mxu0 %v2114
    %v2116 = vand.u32 %v320, 4294901760
    %2117 = vmatpush1.xpose.msra.mxu0 %v2116
    %v2118 = vand.u32 %v318, 4294901760
    %2119 = vmatprep.subr.mxu0 %v2118
    %v2120 = vand.u32 %v316, 4294901760
    %2121 = vmatpush1.xpose.msra.mxu0 %v2120
    %2122 = vmatprep.subr.mxu0 0.0
    %2123 = vmatpush2.xpose.msra.mxu0 0.0
    %2124 = vmatprep.subr.mxu0 0.0
    %2125 = vmatpush2.xpose.msra.mxu0 0.0
    %2126 = vmatprep.subr.mxu0 0.0
    %2127 = vmatpush2.xpose.msra.mxu0 0.0
    %2128 = vmatprep.subr.mxu0 0.0
    %2129 = vmatpush2.xpose.msra.mxu0 0.0
    %2130 = vmatprep.subr.mxu0 0.0
    %2131 = vmatpush2.xpose.msra.mxu0 0.0
    %2132 = vmatprep.subr.mxu0 0.0
    %2133 = vmatpush2.xpose.msra.mxu0 0.0
    %2134 = vmatprep.subr.mxu0 0.0
    %2135 = vmatpush2.xpose.msra.mxu0 0.0
    %2136 = vmatprep.subr.mxu0 0.0
    %2137 = vmatpush2.xpose.msra.mxu0 0.0
    %2138 = vmatprep.subr.mxu0 0.0
    %2139 = vmatpush2.xpose.msra.mxu0 0.0
    %2140 = vmatprep.subr.mxu0 0.0
    %2141 = vmatpush2.xpose.msra.mxu0 0.0
    %2142 = vmatprep.subr.mxu0 0.0
    %2143 = vmatpush2.xpose.msra.mxu0 0.0
    %2144 = vmatprep.subr.mxu0 0.0
    %2145 = vmatpush2.xpose.msra.mxu0 0.0
    %2146 = vmatprep.subr.mxu0 0.0
    %2147 = vmatpush2.xpose.msra.mxu0 0.0
    %2148 = vmatprep.subr.mxu0 0.0
    %2149 = vmatpush2.xpose.msra.mxu0 0.0
    %2150 = vmatprep.subr.mxu0 0.0
    %2151 = vmatpush2.xpose.msra.mxu0 0.0
    %2152 = vmatprep.subr.mxu0 0.0
    %2153 = vmatpush2.xpose.msra.mxu0 0.0
    %v2154 = vand.u32 %v331, 4294901760
    %v2155 = vsub.f32 %v331, %v2154
    %v2156 = vand.u32 %v2155, 4294901760
    %2157 = vmatprep.mubr.f32.mxu0 %v2156
    %v2158 = vand.u32 %v330, 4294901760
    %v2159 = vsub.f32 %v330, %v2158
    %v2160 = vand.u32 %v2159, 4294901760
    %2161 = vmatmul.mubr.f32.gmra.mxu0 %v2160
    %v2162 = vpop.f32.mrf.mxu0
    %v2163 = vadd.f32 %v2083, %v2162
    %v2164 = vpop.f32.mrf.mxu0
    %2165 = vdwg.mxu0
    %2166 = vmatprep.subr.mxu0 0.0
    %2167 = vmatpush1.xpose.msra.mxu0 0.0
    %2168 = vmatprep.subr.mxu0 0.0
    %2169 = vmatpush1.xpose.msra.mxu0 0.0
    %2170 = vmatprep.subr.mxu0 0.0
    %2171 = vmatpush1.xpose.msra.mxu0 0.0
    %2172 = vmatprep.subr.mxu0 0.0
    %2173 = vmatpush1.xpose.msra.mxu0 0.0
    %2174 = vmatprep.subr.mxu0 0.0
    %2175 = vmatpush1.xpose.msra.mxu0 0.0
    %2176 = vmatprep.subr.mxu0 0.0
    %2177 = vmatpush1.xpose.msra.mxu0 0.0
    %2178 = vmatprep.subr.mxu0 0.0
    %2179 = vmatpush1.xpose.msra.mxu0 0.0
    %2180 = vmatprep.subr.mxu0 0.0
    %2181 = vmatpush1.xpose.msra.mxu0 0.0
    %2182 = vmatprep.subr.mxu0 0.0
    %2183 = vmatpush1.xpose.msra.mxu0 0.0
    %2184 = vmatprep.subr.mxu0 0.0
    %2185 = vmatpush1.xpose.msra.mxu0 0.0
    %2186 = vmatprep.subr.mxu0 0.0
    %2187 = vmatpush1.xpose.msra.mxu0 0.0
    %2188 = vmatprep.subr.mxu0 0.0
    %2189 = vmatpush1.xpose.msra.mxu0 0.0
    %2190 = vmatprep.subr.mxu0 0.0
    %2191 = vmatpush1.xpose.msra.mxu0 0.0
    %2192 = vmatprep.subr.mxu0 0.0
    %2193 = vmatpush1.xpose.msra.mxu0 0.0
    %v2194 = vand.u32 %v322, 4294901760
    %v2195 = vsub.f32 %v322, %v2194
    %v2196 = vand.u32 %v2195, 4294901760
    %2197 = vmatprep.subr.mxu0 %v2196
    %v2198 = vand.u32 %v320, 4294901760
    %v2199 = vsub.f32 %v320, %v2198
    %v2200 = vand.u32 %v2199, 4294901760
    %2201 = vmatpush1.xpose.msra.mxu0 %v2200
    %v2202 = vand.u32 %v318, 4294901760
    %v2203 = vsub.f32 %v318, %v2202
    %v2204 = vand.u32 %v2203, 4294901760
    %2205 = vmatprep.subr.mxu0 %v2204
    %v2206 = vand.u32 %v316, 4294901760
    %v2207 = vsub.f32 %v316, %v2206
    %v2208 = vand.u32 %v2207, 4294901760
    %2209 = vmatpush1.xpose.msra.mxu0 %v2208
    %2210 = vmatprep.subr.mxu0 0.0
    %2211 = vmatpush2.xpose.msra.mxu0 0.0
    %2212 = vmatprep.subr.mxu0 0.0
    %2213 = vmatpush2.xpose.msra.mxu0 0.0
    %2214 = vmatprep.subr.mxu0 0.0
    %2215 = vmatpush2.xpose.msra.mxu0 0.0
    %2216 = vmatprep.subr.mxu0 0.0
    %2217 = vmatpush2.xpose.msra.mxu0 0.0
    %2218 = vmatprep.subr.mxu0 0.0
    %2219 = vmatpush2.xpose.msra.mxu0 0.0
    %2220 = vmatprep.subr.mxu0 0.0
    %2221 = vmatpush2.xpose.msra.mxu0 0.0
    %2222 = vmatprep.subr.mxu0 0.0
    %2223 = vmatpush2.xpose.msra.mxu0 0.0
    %2224 = vmatprep.subr.mxu0 0.0
    %2225 = vmatpush2.xpose.msra.mxu0 0.0
    %2226 = vmatprep.subr.mxu0 0.0
    %2227 = vmatpush2.xpose.msra.mxu0 0.0
    %2228 = vmatprep.subr.mxu0 0.0
    %2229 = vmatpush2.xpose.msra.mxu0 0.0
    %2230 = vmatprep.subr.mxu0 0.0
    %2231 = vmatpush2.xpose.msra.mxu0 0.0
    %2232 = vmatprep.subr.mxu0 0.0
    %2233 = vmatpush2.xpose.msra.mxu0 0.0
    %2234 = vmatprep.subr.mxu0 0.0
    %2235 = vmatpush2.xpose.msra.mxu0 0.0
    %2236 = vmatprep.subr.mxu0 0.0
    %2237 = vmatpush2.xpose.msra.mxu0 0.0
    %2238 = vmatprep.subr.mxu0 0.0
    %2239 = vmatpush2.xpose.msra.mxu0 0.0
    %2240 = vmatprep.subr.mxu0 0.0
    %2241 = vmatpush2.xpose.msra.mxu0 0.0
    %v2242 = vand.u32 %v331, 4294901760
    %2243 = vmatprep.mubr.f32.mxu0 %v2242
    %v2244 = vand.u32 %v330, 4294901760
    %2245 = vmatmul.mubr.f32.gmra.mxu0 %v2244
    %v2246 = vpop.f32.mrf.mxu0
    %v2247 = vadd.f32 %v2163, %v2246
    %v2248 = vpop.f32.mrf.mxu0
    %2249 = vdwg.mxu0
    %2250 = vmatprep.subr.mxu0 0.0
    %2251 = vmatpush1.xpose.msra.mxu0 0.0
    %2252 = vmatprep.subr.mxu0 0.0
    %2253 = vmatpush1.xpose.msra.mxu0 0.0
    %2254 = vmatprep.subr.mxu0 0.0
    %2255 = vmatpush1.xpose.msra.mxu0 0.0
    %2256 = vmatprep.subr.mxu0 0.0
    %2257 = vmatpush1.xpose.msra.mxu0 0.0
    %2258 = vmatprep.subr.mxu0 0.0
    %2259 = vmatpush1.xpose.msra.mxu0 0.0
    %2260 = vmatprep.subr.mxu0 0.0
    %2261 = vmatpush1.xpose.msra.mxu0 0.0
    %2262 = vmatprep.subr.mxu0 0.0
    %2263 = vmatpush1.xpose.msra.mxu0 0.0
    %2264 = vmatprep.subr.mxu0 0.0
    %2265 = vmatpush1.xpose.msra.mxu0 0.0
    %2266 = vmatprep.subr.mxu0 0.0
    %2267 = vmatpush1.xpose.msra.mxu0 0.0
    %2268 = vmatprep.subr.mxu0 0.0
    %2269 = vmatpush1.xpose.msra.mxu0 0.0
    %2270 = vmatprep.subr.mxu0 0.0
    %2271 = vmatpush1.xpose.msra.mxu0 0.0
    %2272 = vmatprep.subr.mxu0 0.0
    %2273 = vmatpush1.xpose.msra.mxu0 0.0
    %2274 = vmatprep.subr.mxu0 0.0
    %2275 = vmatpush1.xpose.msra.mxu0 0.0
    %2276 = vmatprep.subr.mxu0 0.0
    %2277 = vmatpush1.xpose.msra.mxu0 0.0
    %v2278 = vand.u32 %v322, 4294901760
    %2279 = vmatprep.subr.mxu0 %v2278
    %v2280 = vand.u32 %v320, 4294901760
    %2281 = vmatpush1.xpose.msra.mxu0 %v2280
    %v2282 = vand.u32 %v318, 4294901760
    %2283 = vmatprep.subr.mxu0 %v2282
    %v2284 = vand.u32 %v316, 4294901760
    %2285 = vmatpush1.xpose.msra.mxu0 %v2284
    %2286 = vmatprep.subr.mxu0 0.0
    %2287 = vmatpush2.xpose.msra.mxu0 0.0
    %2288 = vmatprep.subr.mxu0 0.0
    %2289 = vmatpush2.xpose.msra.mxu0 0.0
    %2290 = vmatprep.subr.mxu0 0.0
    %2291 = vmatpush2.xpose.msra.mxu0 0.0
    %2292 = vmatprep.subr.mxu0 0.0
    %2293 = vmatpush2.xpose.msra.mxu0 0.0
    %2294 = vmatprep.subr.mxu0 0.0
    %2295 = vmatpush2.xpose.msra.mxu0 0.0
    %2296 = vmatprep.subr.mxu0 0.0
    %2297 = vmatpush2.xpose.msra.mxu0 0.0
    %2298 = vmatprep.subr.mxu0 0.0
    %2299 = vmatpush2.xpose.msra.mxu0 0.0
    %2300 = vmatprep.subr.mxu0 0.0
    %2301 = vmatpush2.xpose.msra.mxu0 0.0
    %2302 = vmatprep.subr.mxu0 0.0
    %2303 = vmatpush2.xpose.msra.mxu0 0.0
    %2304 = vmatprep.subr.mxu0 0.0
    %2305 = vmatpush2.xpose.msra.mxu0 0.0
    %2306 = vmatprep.subr.mxu0 0.0
    %2307 = vmatpush2.xpose.msra.mxu0 0.0
    %2308 = vmatprep.subr.mxu0 0.0
    %2309 = vmatpush2.xpose.msra.mxu0 0.0
    %2310 = vmatprep.subr.mxu0 0.0
    %2311 = vmatpush2.xpose.msra.mxu0 0.0
    %2312 = vmatprep.subr.mxu0 0.0
    %2313 = vmatpush2.xpose.msra.mxu0 0.0
    %2314 = vmatprep.subr.mxu0 0.0
    %2315 = vmatpush2.xpose.msra.mxu0 0.0
    %2316 = vmatprep.subr.mxu0 0.0
    %2317 = vmatpush2.xpose.msra.mxu0 0.0
    %v2318 = vand.u32 %v331, 4294901760
    %2319 = vmatprep.mubr.f32.mxu0 %v2318
    %v2320 = vand.u32 %v330, 4294901760
    %2321 = vmatmul.mubr.f32.gmra.mxu0 %v2320
    %v2322 = vpop.f32.mrf.mxu0
    %v2323 = vadd.f32 %v2247, %v2322
    %v2324 = vpop.f32.mrf.mxu0
    %2325 = vdwg.mxu0
    %vm2326 = vcmask 130048
    %2327 = vst.msk [vmem:[%s4] sm:$0xff] %vm2326, %v2323
    // Predicated region
    $region26: #{_lambda_.1} parent=1 // pred_check
      _
    $region27: #{_lambda_.1} parent=1 // pred_check_branch
      %2329 = sbr.rel (0) target = $region29
    $region28: #{_lambda_.1} parent=1 // pred_region
      _
    $region29: #{_lambda_.1} parent=1 // pred_fallthru
      _
    // Predicated region
    $region30: #{_lambda_.1} parent=1 // pred_check
      _
    $region31: #{_lambda_.1} parent=1 // pred_check_branch
      %2331 = sbr.rel (0) target = $region33
    $region32: #{_lambda_.1} parent=1 // pred_region
      _
    $region33: #{_lambda_.1} parent=1 // pred_fallthru
      _
    %2332 = vsyncpa [#allocation4], 1
    %2333 = vsyncpa [#allocation6], 1

</llo_original>
